<compile_context>
chip_gen: v7x
topology: tpu7x:2x2x1
jax: 0.10.0
libtpu: 0.0.40
codegen_flags: <defaults>
</compile_context>

<pallas_src>
import jax
import jax.numpy as jnp
from jax import lax
from jax.experimental import pallas as pl
from jax.experimental.pallas import tpu as pltpu


# --------------------------- fused Pallas kernel --------------------------- #

def _lenet_fused_kernel(lhs1_ref, r1_ref, r2_ref, w5_ref, w6_ref,
                        g1_ref, g2_ref, pvec_ref, out_ref, p1_ref):
    # lhs1_ref: (24B, 140)  conv1 LHS, rows (p, r2, m2, b), cols (ki, w)
    # r1_ref  : (140, 2*n1*12)   conv1 weights, taps in K, col parity in N
    # r2_ref  : (5, n1*12, 2*n2*4) conv2 weights per tap, col parity in N
    # w5_ref  : (4, n2*4, fc1)   c5 weights, PyTorch flatten order pre-applied
    # w6_ref  : (fc1, fc2)
    # g1_ref  : (n1*12, n1*12)   group-average matrix for bn1 batch stats
    # g2_ref  : (n2*4, n2*4)     group-average matrix for bn2 batch stats
    # pvec_ref: (8, >=n1*12)     packed bias/gamma/beta/fc-bias vectors
    # p1_ref  : (12B, n1*12)     VMEM scratch for bn1-normalised activations
    f32 = jnp.float32
    eps = 1e-5
    B = out_ref.shape[0]
    fc1 = w6_ref.shape[0]
    fc2 = out_ref.shape[1]
    n1c = g1_ref.shape[0]          # n1 * 12
    n2c = g2_ref.shape[0]          # n2 * 4
    n_taps = r2_ref.shape[0]       # 5

    # --------------------- conv1: one MXU matmul --------------------------- #
    c1 = jnp.dot(lhs1_ref[...], r1_ref[...],
                 preferred_element_type=f32)                 # (24B, 2*n1c)

    # ------------- maxpool 2x2 (col parity = N halves, row parity = M halves)
    m_q = jnp.maximum(c1[:, :n1c], c1[:, n1c:])              # q-max  (24B, n1c)
    half1 = m_q.shape[0] // 2
    pooled = jnp.maximum(m_q[:half1, :], m_q[half1:, :])     # p-max  (12B, n1c)

    bias1 = pvec_ref[0:1, 0:n1c]
    gamma1 = pvec_ref[1:2, 0:n1c]
    beta1 = pvec_ref[2:3, 0:n1c]
    p1 = jnp.maximum(pooled + bias1, 0.0)                    # relu(pool + bias)

    # ------------- bn1 (training-mode batch stats) via group-average matmul - #
    s1 = jnp.sum(p1, axis=0, keepdims=True)                  # (1, n1c)
    s2 = jnp.sum(p1 * p1, axis=0, keepdims=True)
    mean1 = jnp.dot(s1, g1_ref[...], preferred_element_type=f32)
    ex21 = jnp.dot(s2, g1_ref[...], preferred_element_type=f32)
    var1 = ex21 - mean1 * mean1
    scale1 = gamma1 * lax.rsqrt(var1 + eps)
    p1_ref[...] = (p1 - mean1) * scale1 + beta1              # (12B, n1c) scratch

    # --------------------- conv2: 10 stacked-M matmuls --------------------- #
    # rows of p1_ref are (r2, m2, b); slab for (p', ki) is one contiguous
    # 4B-row slice holding input rows I = 2U + p' + ki for U=0..3, b=0..B-1.
    zq = []
    for pp in range(2):
        acc = None
        for ki in range(n_taps):
            s = pp + ki
            src = (s % 2) * (6 * B) + (s // 2) * B
            slab = p1_ref[src:src + 4 * B, :]                # (4B, n1c)
            d = jnp.dot(slab, r2_ref[ki], preferred_element_type=f32)
            acc = d if acc is None else acc + d              # (4B, 2*n2c)
        zq.append(jnp.maximum(acc[:, :n2c], acc[:, n2c:]))   # q'-max
    z = jnp.maximum(zq[0], zq[1])                            # p'-max (4B, n2c)

    bias2 = pvec_ref[3:4, 0:n2c]
    gamma2 = pvec_ref[4:5, 0:n2c]
    beta2 = pvec_ref[5:6, 0:n2c]
    z = jnp.maximum(z + bias2, 0.0)                          # relu(pool + bias)

    # ------------- bn2 (training-mode batch stats) via group-average matmul - #
    t1 = jnp.sum(z, axis=0, keepdims=True)
    t2 = jnp.sum(z * z, axis=0, keepdims=True)
    mean2 = jnp.dot(t1, g2_ref[...], preferred_element_type=f32)
    ex22 = jnp.dot(t2, g2_ref[...], preferred_element_type=f32)
    var2 = ex22 - mean2 * mean2
    scale2 = gamma2 * lax.rsqrt(var2 + eps)
    zn = (z - mean2) * scale2 + beta2                        # (4B, n2c), rows (U,b)

    # ------------------ c5 + f6, batched over B ---------------------------- #
    b5 = pvec_ref[6:7, 0:fc1]
    b6 = pvec_ref[7:8, 0:fc2]
    h = jnp.dot(zn[0:B, :], w5_ref[0], preferred_element_type=f32)
    for U in range(1, 4):
        h = h + jnp.dot(zn[U * B:(U + 1) * B, :], w5_ref[U],
                        preferred_element_type=f32)
    h = h + b5                                               # (B, fc1)
    out_ref[...] = jnp.dot(h, w6_ref[...], preferred_element_type=f32) + b6


# ------------------ one-time parameter preparation (host/XLA) --------------- #

def prepare_lenet(params, batch_size):
    """Fold taps / output channels / pool column-parity / BN group averaging /
    the PyTorch flatten permutation into kernel-ready constant matrices.
    Done once, outside the kernel.  `batch_size` is baked into the BN
    group-average matrices (training-mode batch statistics)."""
    n1 = params["c1_w"].shape[0]
    n2 = params["c3_w"].shape[0]
    fc1 = params["c5_w"].shape[0]
    fc2 = params["f6_w"].shape[0]
    B = batch_size

    qv = jnp.arange(2)
    kjv = jnp.arange(5)

    # conv1 weights: row = ki*28 + w, col = q*(n1*12) + co*12 + J
    wv = jnp.arange(28)
    Jv = jnp.arange(12)
    sel1 = (wv[None, None, :, None] ==
            (2 * Jv[None, None, None, :] + qv[:, None, None, None]
             + kjv[None, :, None, None])).astype(jnp.float32)        # (2,5,28,12)
    w1c = params["c1_w"][:, 0, :, :]                                  # (n1,5,5)
    r1 = jnp.einsum("oik,qkwj->iwqoj", w1c, sel1).reshape(5 * 28, 2 * n1 * 12)

    # conv2 weights: per tap ki, row = c1*12 + J, col = q*(n2*4) + c2*4 + V
    jv = jnp.arange(12)
    Vv = jnp.arange(4)
    sel2 = (jv[None, None, :, None] ==
            (2 * Vv[None, None, None, :] + qv[:, None, None, None]
             + kjv[None, :, None, None])).astype(jnp.float32)        # (2,5,12,4)
    r2 = jnp.einsum("ocik,qkjv->icjqov",
                    params["c3_w"], sel2).reshape(5, n1 * 12, 2 * n2 * 4)

    # BN group-average matrices (return per-channel means, lane-broadcast).
    g1 = jnp.kron(jnp.eye(n1, dtype=jnp.float32),
                  jnp.ones((12, 12), jnp.float32)) / float(B * 12 * 12)
    g2 = jnp.kron(jnp.eye(n2, dtype=jnp.float32),
                  jnp.ones((4, 4), jnp.float32)) / float(B * 4 * 4)

    # c5 weight with the PyTorch (C,H,W) flatten order pre-permuted so the
    # kernel consumes its own (U, c2*4+V) activation layout directly.
    w5p = jnp.transpose(params["c5_w"].reshape(fc1, n2, 4, 4),
                        (2, 1, 3, 0)).reshape(4, n2 * 4, fc1)

    # Pack all small per-channel / bias vectors into one operand (one DMA).
    W = max(n1 * 12, n2 * 4, fc1, fc2)

    def row(v):
        v = v.astype(jnp.float32)
        return jnp.pad(v, (0, W - v.shape[0]))[None, :]

    pvec = jnp.concatenate([
        row(jnp.repeat(params["c1_b"], 12)),
        row(jnp.repeat(params["bn1_g"], 12)),
        row(jnp.repeat(params["bn1_b"], 12)),
        row(jnp.repeat(params["c3_b"], 4)),
        row(jnp.repeat(params["bn2_g"], 4)),
        row(jnp.repeat(params["bn2_b"], 4)),
        row(params["c5_b"]),
        row(params["f6_b"]),
    ], axis=0)                                                        # (8, W)

    return dict(r1=r1, r2=r2, g1=g1, g2=g2, w5p=w5p,
                w6t=params["f6_w"].T, pvec=pvec)


def lenet_forward(prep, x_nchw):
    B = x_nchw.shape[0]
    fc2 = prep["w6t"].shape[1]
    n1c = prep["g1"].shape[0]
    x2 = x_nchw[:, 0, :, :].astype(jnp.float32)                       # (B, 28, 28)

    # conv1 LHS: rows ordered (p, r2, m2, b), cols (ki, w); all 5 row taps
    # folded into K.  ~27 KB of replicated input, built once per call in XLA.
    pv = jnp.arange(2)
    r2v = jnp.arange(2)
    m2v = jnp.arange(6)
    kiv = jnp.arange(5)
    row_idx = (pv[:, None, None, None] + 2 * r2v[None, :, None, None]
               + 4 * m2v[None, None, :, None]
               + kiv[None, None, None, :])                            # (2,2,6,5)
    gath = x2[:, row_idx, :]                                          # (B,2,2,6,5,28)
    lhs1 = jnp.transpose(gath, (1, 2, 3, 0, 4, 5)).reshape(24 * B, 5 * 28)

    operands = (lhs1, prep["r1"], prep["r2"], prep["w5p"], prep["w6t"],
                prep["g1"], prep["g2"], prep["pvec"])
    vmem = pl.BlockSpec(memory_space=pltpu.MemorySpace.VMEM)
    return pl.pallas_call(
        _lenet_fused_kernel,
        out_shape=jax.ShapeDtypeStruct((B, fc2), jnp.float32),
        in_specs=[vmem] * len(operands),
        out_specs=vmem,
        scratch_shapes=[pltpu.VMEM((12 * B, n1c), jnp.float32)],
    )(*operands)


# ------------------------- pure-JAX reference model ------------------------- #

def lenet_reference(params, x):
    def conv(y, w, b):
        out = lax.conv_general_dilated(y, w, (1, 1), "VALID",
                                       dimension_numbers=("NCHW", "OIHW", "NCHW"))
        return out + b[None, :, None, None]

    def pool2(y):
        B, C, H, W = y.shape
        return jnp.max(y.reshape(B, C, H // 2, 2, W // 2, 2), axis=(3, 5))

    def bn(y, g, b):
        mu = jnp.mean(y, axis=(0, 2, 3), keepdims=True)
        var = jnp.mean((y - mu) ** 2, axis=(0, 2, 3), keepdims=True)
        return (y - mu) * lax.rsqrt(var + 1e-5) * g[None, :, None, None] \
            + b[None, :, None, None]

    y = conv(x, params["c1_w"], params["c1_b"])
    y = bn(jnp.maximum(pool2(y), 0.0), params["bn1_g"], params["bn1_b"])
    y = conv(y, params["c3_w"], params["c3_b"])
    y = bn(jnp.maximum(pool2(y), 0.0), params["bn2_g"], params["bn2_b"])
    v = y.reshape(y.shape[0], -1)
    h = v @ params["c5_w"].T + params["c5_b"]
    return h @ params["f6_w"].T + params["f6_b"]


def init_params(key, n1, n2, fc1, fc2):
    ks = jax.random.split(key, 8)
    return {
        "c1_w": jax.random.normal(ks[0], (n1, 1, 5, 5), jnp.float32) * 0.1,
        "c1_b": jax.random.normal(ks[1], (n1,), jnp.float32) * 0.1,
        "c3_w": jax.random.normal(ks[2], (n2, n1, 5, 5), jnp.float32) * 0.1,
        "c3_b": jax.random.normal(ks[3], (n2,), jnp.float32) * 0.1,
        "bn1_g": jnp.ones((n1,), jnp.float32),
        "bn1_b": jnp.zeros((n1,), jnp.float32),
        "bn2_g": jnp.ones((n2,), jnp.float32),
        "bn2_b": jnp.zeros((n2,), jnp.float32),
        "c5_w": jax.random.normal(ks[4], (fc1, n2 * 4 * 4), jnp.float32) * 0.1,
        "c5_b": jax.random.normal(ks[5], (fc1,), jnp.float32) * 0.1,
        "f6_w": jax.random.normal(ks[6], (fc2, fc1), jnp.float32) * 0.1,
        "f6_b": jax.random.normal(ks[7], (fc2,), jnp.float32) * 0.1,
    }


if __name__ == "__main__":
    nodesNum1, nodesNum2, nodesFc1, nodesFc2 = 4, 8, 32, 16
    key = jax.random.PRNGKey(0)
    kx, kp = jax.random.split(key)
    # The module requires 28x28 input: 28 -conv5-> 24 -pool-> 12 -conv5-> 8
    # -pool-> 4, matching the nodesNum2*4*4 flatten consumed by c5.
    x = jax.random.normal(kx, (2, 1, 28, 28), jnp.float32)
    params = init_params(kp, nodesNum1, nodesNum2, nodesFc1, nodesFc2)

    prep = prepare_lenet(params, batch_size=x.shape[0])   # one-time weight prep
    fwd = jax.jit(lenet_forward)
    out = jax.block_until_ready(fwd(prep, x))

    ref = jax.block_until_ready(lenet_reference(params, x))
    assert out.shape == (2, nodesFc2) and out.dtype == jnp.float32
    assert jnp.allclose(out, ref, atol=2e-3, rtol=2e-3)
    print("KERNEL_OK")
</pallas_src>

<mosaic_0001>
module attributes {stable_mosaic.version = 11 : i64} {
  func.func @_lenet_fused_kernel(%arg0: memref<48x140xf32, #tpu.memory_space<vmem>>, %arg1: memref<140x96xf32, #tpu.memory_space<vmem>>, %arg2: memref<5x48x64xf32, #tpu.memory_space<vmem>>, %arg3: memref<4x32x32xf32, #tpu.memory_space<vmem>>, %arg4: memref<32x16xf32, #tpu.memory_space<vmem>>, %arg5: memref<48x48xf32, #tpu.memory_space<vmem>>, %arg6: memref<32x32xf32, #tpu.memory_space<vmem>>, %arg7: memref<8x48xf32, #tpu.memory_space<vmem>>, %arg8: memref<2x16xf32, #tpu.memory_space<vmem>>, %arg9: memref<24x48xf32, #tpu.memory_space<vmem>>) attributes {dimension_semantics = [], scalar_prefetch = 0 : i64, scratch_operands = 1 : i64, tpu.core_type = #tpu.core_type<tc>} {
    %c0 = arith.constant 0 : index
    %c0_0 = arith.constant 0 : index
    %0 = vector.load %arg0[%c0, %c0_0] : memref<48x140xf32, #tpu.memory_space<vmem>>, vector<48x140xf32>
    %c0_1 = arith.constant 0 : index
    %c0_2 = arith.constant 0 : index
    %1 = vector.load %arg1[%c0_1, %c0_2] : memref<140x96xf32, #tpu.memory_space<vmem>>, vector<140x96xf32>
    %cst = arith.constant dense<0.000000e+00> : vector<48x96xf32>
    %2 = tpu.matmul %0, %1, %cst {dimension_numbers = #tpu.dot_dimension_numbers<[1], [0], [0], [1], [0, 0, 1, 1], [], []>} : vector<48x140xf32>, vector<140x96xf32>, vector<48x96xf32> -> vector<48x96xf32>
    %3 = vector.extract_strided_slice %2 {offsets = [0, 0], sizes = [48, 48], strides = [1, 1]} : vector<48x96xf32> to vector<48x48xf32>
    %4 = vector.extract_strided_slice %2 {offsets = [0, 48], sizes = [48, 48], strides = [1, 1]} : vector<48x96xf32> to vector<48x48xf32>
    %5 = arith.maximumf %3, %4 : vector<48x48xf32>
    %6 = vector.extract_strided_slice %5 {offsets = [0, 0], sizes = [24, 48], strides = [1, 1]} : vector<48x48xf32> to vector<24x48xf32>
    %7 = vector.extract_strided_slice %5 {offsets = [24, 0], sizes = [24, 48], strides = [1, 1]} : vector<48x48xf32> to vector<24x48xf32>
    %8 = arith.maximumf %6, %7 : vector<24x48xf32>
    %c0_3 = arith.constant 0 : index
    %c0_4 = arith.constant 0 : index
    %9 = vector.load %arg7[%c0_3, %c0_4] : memref<8x48xf32, #tpu.memory_space<vmem>>, vector<1x48xf32>
    %c1 = arith.constant 1 : index
    %c0_5 = arith.constant 0 : index
    %10 = vector.load %arg7[%c1, %c0_5] : memref<8x48xf32, #tpu.memory_space<vmem>>, vector<1x48xf32>
    %c2 = arith.constant 2 : index
    %c0_6 = arith.constant 0 : index
    %11 = vector.load %arg7[%c2, %c0_6] : memref<8x48xf32, #tpu.memory_space<vmem>>, vector<1x48xf32>
    %12 = vector.broadcast %9 : vector<1x48xf32> to vector<24x48xf32>
    %13 = arith.addf %8, %12 : vector<24x48xf32>
    %cst_7 = arith.constant 0.000000e+00 : f32
    %14 = vector.broadcast %cst_7 : f32 to vector<24x48xf32>
    %15 = arith.maximumf %13, %14 : vector<24x48xf32>
    %cst_8 = arith.constant dense<0.000000e+00> : vector<48xf32>
    %16 = vector.multi_reduction <add>, %15, %cst_8 [0] : vector<24x48xf32> to vector<48xf32>
    %17 = vector.shape_cast %16 : vector<48xf32> to vector<1x48xf32>
    %18 = arith.mulf %15, %15 : vector<24x48xf32>
    %cst_9 = arith.constant dense<0.000000e+00> : vector<48xf32>
    %19 = vector.multi_reduction <add>, %18, %cst_9 [0] : vector<24x48xf32> to vector<48xf32>
    %20 = vector.shape_cast %19 : vector<48xf32> to vector<1x48xf32>
    %c0_10 = arith.constant 0 : index
    %c0_11 = arith.constant 0 : index
    %21 = vector.load %arg5[%c0_10, %c0_11] : memref<48x48xf32, #tpu.memory_space<vmem>>, vector<48x48xf32>
    %cst_12 = arith.constant dense<0.000000e+00> : vector<1x48xf32>
    %22 = tpu.matmul %17, %21, %cst_12 {dimension_numbers = #tpu.dot_dimension_numbers<[1], [0], [0], [1], [0, 0, 1, 1], [], []>} : vector<1x48xf32>, vector<48x48xf32>, vector<1x48xf32> -> vector<1x48xf32>
    %c0_13 = arith.constant 0 : index
    %c0_14 = arith.constant 0 : index
    %23 = vector.load %arg5[%c0_13, %c0_14] : memref<48x48xf32, #tpu.memory_space<vmem>>, vector<48x48xf32>
    %cst_15 = arith.constant dense<0.000000e+00> : vector<1x48xf32>
    %24 = tpu.matmul %20, %23, %cst_15 {dimension_numbers = #tpu.dot_dimension_numbers<[1], [0], [0], [1], [0, 0, 1, 1], [], []>} : vector<1x48xf32>, vector<48x48xf32>, vector<1x48xf32> -> vector<1x48xf32>
    %25 = arith.mulf %22, %22 : vector<1x48xf32>
    %26 = arith.subf %24, %25 : vector<1x48xf32>
    %cst_16 = arith.constant 9.99999974E-6 : f32
    %27 = vector.broadcast %cst_16 : f32 to vector<1x48xf32>
    %28 = arith.addf %26, %27 : vector<1x48xf32>
    %29 = math.rsqrt %28 : vector<1x48xf32>
    %30 = arith.mulf %10, %29 : vector<1x48xf32>
    %31 = vector.broadcast %22 : vector<1x48xf32> to vector<24x48xf32>
    %32 = arith.subf %15, %31 : vector<24x48xf32>
    %33 = vector.broadcast %30 : vector<1x48xf32> to vector<24x48xf32>
    %34 = arith.mulf %32, %33 : vector<24x48xf32>
    %35 = vector.broadcast %11 : vector<1x48xf32> to vector<24x48xf32>
    %36 = arith.addf %34, %35 : vector<24x48xf32>
    %c0_17 = arith.constant 0 : index
    %c0_18 = arith.constant 0 : index
    %37 = vector.load %arg9[%c0_17, %c0_18] : memref<24x48xf32, #tpu.memory_space<vmem>>, vector<24x48xf32>
    tpu.vector_store %arg9[%c0_17, %c0_18], %36 {strides = array<i32>} : memref<24x48xf32, #tpu.memory_space<vmem>>, vector<24x48xf32>,
    %c0_19 = arith.constant 0 : index
    %c0_20 = arith.constant 0 : index
    %38 = vector.load %arg9[%c0_19, %c0_20] : memref<24x48xf32, #tpu.memory_space<vmem>>, vector<8x48xf32>
    %c0_21 = arith.constant 0 : index
    %c0_22 = arith.constant 0 : index
    %c0_23 = arith.constant 0 : index
    %39 = vector.load %arg2[%c0_21, %c0_22, %c0_23] : memref<5x48x64xf32, #tpu.memory_space<vmem>>, vector<1x48x64xf32>
    %40 = vector.shape_cast %39 : vector<1x48x64xf32> to vector<48x64xf32>
    %cst_24 = arith.constant dense<0.000000e+00> : vector<8x64xf32>
    %41 = tpu.matmul %38, %40, %cst_24 {dimension_numbers = #tpu.dot_dimension_numbers<[1], [0], [0], [1], [0, 0, 1, 1], [], []>} : vector<8x48xf32>, vector<48x64xf32>, vector<8x64xf32> -> vector<8x64xf32>
    %c12 = arith.constant 12 : index
    %c0_25 = arith.constant 0 : index
    %42 = vector.load %arg9[%c12, %c0_25] : memref<24x48xf32, #tpu.memory_space<vmem>>, vector<8x48xf32>
    %c1_26 = arith.constant 1 : index
    %c0_27 = arith.constant 0 : index
    %c0_28 = arith.constant 0 : index
    %43 = vector.load %arg2[%c1_26, %c0_27, %c0_28] : memref<5x48x64xf32, #tpu.memory_space<vmem>>, vector<1x48x64xf32>
    %44 = vector.shape_cast %43 : vector<1x48x64xf32> to vector<48x64xf32>
    %cst_29 = arith.constant dense<0.000000e+00> : vector<8x64xf32>
    %45 = tpu.matmul %42, %44, %cst_29 {dimension_numbers = #tpu.dot_dimension_numbers<[1], [0], [0], [1], [0, 0, 1, 1], [], []>} : vector<8x48xf32>, vector<48x64xf32>, vector<8x64xf32> -> vector<8x64xf32>
    %46 = arith.addf %41, %45 : vector<8x64xf32>
    %c2_30 = arith.constant 2 : index
    %c0_31 = arith.constant 0 : index
    %47 = vector.load %arg9[%c2_30, %c0_31] : memref<24x48xf32, #tpu.memory_space<vmem>>, vector<8x48xf32>
    %c2_32 = arith.constant 2 : index
    %c0_33 = arith.constant 0 : index
    %c0_34 = arith.constant 0 : index
    %48 = vector.load %arg2[%c2_32, %c0_33, %c0_34] : memref<5x48x64xf32, #tpu.memory_space<vmem>>, vector<1x48x64xf32>
    %49 = vector.shape_cast %48 : vector<1x48x64xf32> to vector<48x64xf32>
    %cst_35 = arith.constant dense<0.000000e+00> : vector<8x64xf32>
    %50 = tpu.matmul %47, %49, %cst_35 {dimension_numbers = #tpu.dot_dimension_numbers<[1], [0], [0], [1], [0, 0, 1, 1], [], []>} : vector<8x48xf32>, vector<48x64xf32>, vector<8x64xf32> -> vector<8x64xf32>
    %51 = arith.addf %46, %50 : vector<8x64xf32>
    %c14 = arith.constant 14 : index
    %c0_36 = arith.constant 0 : index
    %52 = vector.load %arg9[%c14, %c0_36] : memref<24x48xf32, #tpu.memory_space<vmem>>, vector<8x48xf32>
    %c3 = arith.constant 3 : index
    %c0_37 = arith.constant 0 : index
    %c0_38 = arith.constant 0 : index
    %53 = vector.load %arg2[%c3, %c0_37, %c0_38] : memref<5x48x64xf32, #tpu.memory_space<vmem>>, vector<1x48x64xf32>
    %54 = vector.shape_cast %53 : vector<1x48x64xf32> to vector<48x64xf32>
    %cst_39 = arith.constant dense<0.000000e+00> : vector<8x64xf32>
    %55 = tpu.matmul %52, %54, %cst_39 {dimension_numbers = #tpu.dot_dimension_numbers<[1], [0], [0], [1], [0, 0, 1, 1], [], []>} : vector<8x48xf32>, vector<48x64xf32>, vector<8x64xf32> -> vector<8x64xf32>
    %56 = arith.addf %51, %55 : vector<8x64xf32>
    %c4 = arith.constant 4 : index
    %c0_40 = arith.constant 0 : index
    %57 = vector.load %arg9[%c4, %c0_40] : memref<24x48xf32, #tpu.memory_space<vmem>>, vector<8x48xf32>
    %c4_41 = arith.constant 4 : index
    %c0_42 = arith.constant 0 : index
    %c0_43 = arith.constant 0 : index
    %58 = vector.load %arg2[%c4_41, %c0_42, %c0_43] : memref<5x48x64xf32, #tpu.memory_space<vmem>>, vector<1x48x64xf32>
    %59 = vector.shape_cast %58 : vector<1x48x64xf32> to vector<48x64xf32>
    %cst_44 = arith.constant dense<0.000000e+00> : vector<8x64xf32>
    %60 = tpu.matmul %57, %59, %cst_44 {dimension_numbers = #tpu.dot_dimension_numbers<[1], [0], [0], [1], [0, 0, 1, 1], [], []>} : vector<8x48xf32>, vector<48x64xf32>, vector<8x64xf32> -> vector<8x64xf32>
    %61 = arith.addf %56, %60 : vector<8x64xf32>
    %62 = vector.extract_strided_slice %61 {offsets = [0, 0], sizes = [8, 32], strides = [1, 1]} : vector<8x64xf32> to vector<8x32xf32>
    %63 = vector.extract_strided_slice %61 {offsets = [0, 32], sizes = [8, 32], strides = [1, 1]} : vector<8x64xf32> to vector<8x32xf32>
    %64 = arith.maximumf %62, %63 : vector<8x32xf32>
    %c12_45 = arith.constant 12 : index
    %c0_46 = arith.constant 0 : index
    %65 = vector.load %arg9[%c12_45, %c0_46] : memref<24x48xf32, #tpu.memory_space<vmem>>, vector<8x48xf32>
    %c0_47 = arith.constant 0 : index
    %c0_48 = arith.constant 0 : index
    %c0_49 = arith.constant 0 : index
    %66 = vector.load %arg2[%c0_47, %c0_48, %c0_49] : memref<5x48x64xf32, #tpu.memory_space<vmem>>, vector<1x48x64xf32>
    %67 = vector.shape_cast %66 : vector<1x48x64xf32> to vector<48x64xf32>
    %cst_50 = arith.constant dense<0.000000e+00> : vector<8x64xf32>
    %68 = tpu.matmul %65, %67, %cst_50 {dimension_numbers = #tpu.dot_dimension_numbers<[1], [0], [0], [1], [0, 0, 1, 1], [], []>} : vector<8x48xf32>, vector<48x64xf32>, vector<8x64xf32> -> vector<8x64xf32>
    %c2_51 = arith.constant 2 : index
    %c0_52 = arith.constant 0 : index
    %69 = vector.load %arg9[%c2_51, %c0_52] : memref<24x48xf32, #tpu.memory_space<vmem>>, vector<8x48xf32>
    %c1_53 = arith.constant 1 : index
    %c0_54 = arith.constant 0 : index
    %c0_55 = arith.constant 0 : index
    %70 = vector.load %arg2[%c1_53, %c0_54, %c0_55] : memref<5x48x64xf32, #tpu.memory_space<vmem>>, vector<1x48x64xf32>
    %71 = vector.shape_cast %70 : vector<1x48x64xf32> to vector<48x64xf32>
    %cst_56 = arith.constant dense<0.000000e+00> : vector<8x64xf32>
    %72 = tpu.matmul %69, %71, %cst_56 {dimension_numbers = #tpu.dot_dimension_numbers<[1], [0], [0], [1], [0, 0, 1, 1], [], []>} : vector<8x48xf32>, vector<48x64xf32>, vector<8x64xf32> -> vector<8x64xf32>
    %73 = arith.addf %68, %72 : vector<8x64xf32>
    %c14_57 = arith.constant 14 : index
    %c0_58 = arith.constant 0 : index
    %74 = vector.load %arg9[%c14_57, %c0_58] : memref<24x48xf32, #tpu.memory_space<vmem>>, vector<8x48xf32>
    %c2_59 = arith.constant 2 : index
    %c0_60 = arith.constant 0 : index
    %c0_61 = arith.constant 0 : index
    %75 = vector.load %arg2[%c2_59, %c0_60, %c0_61] : memref<5x48x64xf32, #tpu.memory_space<vmem>>, vector<1x48x64xf32>
    %76 = vector.shape_cast %75 : vector<1x48x64xf32> to vector<48x64xf32>
    %cst_62 = arith.constant dense<0.000000e+00> : vector<8x64xf32>
    %77 = tpu.matmul %74, %76, %cst_62 {dimension_numbers = #tpu.dot_dimension_numbers<[1], [0], [0], [1], [0, 0, 1, 1], [], []>} : vector<8x48xf32>, vector<48x64xf32>, vector<8x64xf32> -> vector<8x64xf32>
    %78 = arith.addf %73, %77 : vector<8x64xf32>
    %c4_63 = arith.constant 4 : index
    %c0_64 = arith.constant 0 : index
    %79 = vector.load %arg9[%c4_63, %c0_64] : memref<24x48xf32, #tpu.memory_space<vmem>>, vector<8x48xf32>
    %c3_65 = arith.constant 3 : index
    %c0_66 = arith.constant 0 : index
    %c0_67 = arith.constant 0 : index
    %80 = vector.load %arg2[%c3_65, %c0_66, %c0_67] : memref<5x48x64xf32, #tpu.memory_space<vmem>>, vector<1x48x64xf32>
    %81 = vector.shape_cast %80 : vector<1x48x64xf32> to vector<48x64xf32>
    %cst_68 = arith.constant dense<0.000000e+00> : vector<8x64xf32>
    %82 = tpu.matmul %79, %81, %cst_68 {dimension_numbers = #tpu.dot_dimension_numbers<[1], [0], [0], [1], [0, 0, 1, 1], [], []>} : vector<8x48xf32>, vector<48x64xf32>, vector<8x64xf32> -> vector<8x64xf32>
    %83 = arith.addf %78, %82 : vector<8x64xf32>
    %c16 = arith.constant 16 : index
    %c0_69 = arith.constant 0 : index
    %84 = vector.load %arg9[%c16, %c0_69] : memref<24x48xf32, #tpu.memory_space<vmem>>, vector<8x48xf32>
    %c4_70 = arith.constant 4 : index
    %c0_71 = arith.constant 0 : index
    %c0_72 = arith.constant 0 : index
    %85 = vector.load %arg2[%c4_70, %c0_71, %c0_72] : memref<5x48x64xf32, #tpu.memory_space<vmem>>, vector<1x48x64xf32>
    %86 = vector.shape_cast %85 : vector<1x48x64xf32> to vector<48x64xf32>
    %cst_73 = arith.constant dense<0.000000e+00> : vector<8x64xf32>
    %87 = tpu.matmul %84, %86, %cst_73 {dimension_numbers = #tpu.dot_dimension_numbers<[1], [0], [0], [1], [0, 0, 1, 1], [], []>} : vector<8x48xf32>, vector<48x64xf32>, vector<8x64xf32> -> vector<8x64xf32>
    %88 = arith.addf %83, %87 : vector<8x64xf32>
    %89 = vector.extract_strided_slice %88 {offsets = [0, 0], sizes = [8, 32], strides = [1, 1]} : vector<8x64xf32> to vector<8x32xf32>
    %90 = vector.extract_strided_slice %88 {offsets = [0, 32], sizes = [8, 32], strides = [1, 1]} : vector<8x64xf32> to vector<8x32xf32>
    %91 = arith.maximumf %89, %90 : vector<8x32xf32>
    %92 = arith.maximumf %64, %91 : vector<8x32xf32>
    %c3_74 = arith.constant 3 : index
    %c0_75 = arith.constant 0 : index
    %93 = vector.load %arg7[%c3_74, %c0_75] : memref<8x48xf32, #tpu.memory_space<vmem>>, vector<1x32xf32>
    %c4_76 = arith.constant 4 : index
    %c0_77 = arith.constant 0 : index
    %94 = vector.load %arg7[%c4_76, %c0_77] : memref<8x48xf32, #tpu.memory_space<vmem>>, vector<1x32xf32>
    %c5 = arith.constant 5 : index
    %c0_78 = arith.constant 0 : index
    %95 = vector.load %arg7[%c5, %c0_78] : memref<8x48xf32, #tpu.memory_space<vmem>>, vector<1x32xf32>
    %96 = vector.broadcast %93 : vector<1x32xf32> to vector<8x32xf32>
    %97 = arith.addf %92, %96 : vector<8x32xf32>
    %cst_79 = arith.constant 0.000000e+00 : f32
    %98 = vector.broadcast %cst_79 : f32 to vector<8x32xf32>
    %99 = arith.maximumf %97, %98 : vector<8x32xf32>
    %cst_80 = arith.constant dense<0.000000e+00> : vector<32xf32>
    %100 = vector.multi_reduction <add>, %99, %cst_80 [0] : vector<8x32xf32> to vector<32xf32>
    %101 = vector.shape_cast %100 : vector<32xf32> to vector<1x32xf32>
    %102 = arith.mulf %99, %99 : vector<8x32xf32>
    %cst_81 = arith.constant dense<0.000000e+00> : vector<32xf32>
    %103 = vector.multi_reduction <add>, %102, %cst_81 [0] : vector<8x32xf32> to vector<32xf32>
    %104 = vector.shape_cast %103 : vector<32xf32> to vector<1x32xf32>
    %c0_82 = arith.constant 0 : index
    %c0_83 = arith.constant 0 : index
    %105 = vector.load %arg6[%c0_82, %c0_83] : memref<32x32xf32, #tpu.memory_space<vmem>>, vector<32x32xf32>
    %cst_84 = arith.constant dense<0.000000e+00> : vector<1x32xf32>
    %106 = tpu.matmul %101, %105, %cst_84 {dimension_numbers = #tpu.dot_dimension_numbers<[1], [0], [0], [1], [0, 0, 1, 1], [], []>} : vector<1x32xf32>, vector<32x32xf32>, vector<1x32xf32> -> vector<1x32xf32>
    %c0_85 = arith.constant 0 : index
    %c0_86 = arith.constant 0 : index
    %107 = vector.load %arg6[%c0_85, %c0_86] : memref<32x32xf32, #tpu.memory_space<vmem>>, vector<32x32xf32>
    %cst_87 = arith.constant dense<0.000000e+00> : vector<1x32xf32>
    %108 = tpu.matmul %104, %107, %cst_87 {dimension_numbers = #tpu.dot_dimension_numbers<[1], [0], [0], [1], [0, 0, 1, 1], [], []>} : vector<1x32xf32>, vector<32x32xf32>, vector<1x32xf32> -> vector<1x32xf32>
    %109 = arith.mulf %106, %106 : vector<1x32xf32>
    %110 = arith.subf %108, %109 : vector<1x32xf32>
    %cst_88 = arith.constant 9.99999974E-6 : f32
    %111 = vector.broadcast %cst_88 : f32 to vector<1x32xf32>
    %112 = arith.addf %110, %111 : vector<1x32xf32>
    %113 = math.rsqrt %112 : vector<1x32xf32>
    %114 = arith.mulf %94, %113 : vector<1x32xf32>
    %115 = vector.broadcast %106 : vector<1x32xf32> to vector<8x32xf32>
    %116 = arith.subf %99, %115 : vector<8x32xf32>
    %117 = vector.broadcast %114 : vector<1x32xf32> to vector<8x32xf32>
    %118 = arith.mulf %116, %117 : vector<8x32xf32>
    %119 = vector.broadcast %95 : vector<1x32xf32> to vector<8x32xf32>
    %120 = arith.addf %118, %119 : vector<8x32xf32>
    %c6 = arith.constant 6 : index
    %c0_89 = arith.constant 0 : index
    %121 = vector.load %arg7[%c6, %c0_89] : memref<8x48xf32, #tpu.memory_space<vmem>>, vector<1x32xf32>
    %c7 = arith.constant 7 : index
    %c0_90 = arith.constant 0 : index
    %122 = vector.load %arg7[%c7, %c0_90] : memref<8x48xf32, #tpu.memory_space<vmem>>, vector<1x16xf32>
    %123 = vector.extract_strided_slice %120 {offsets = [0, 0], sizes = [2, 32], strides = [1, 1]} : vector<8x32xf32> to vector<2x32xf32>
    %c0_91 = arith.constant 0 : index
    %c0_92 = arith.constant 0 : index
    %c0_93 = arith.constant 0 : index
    %124 = vector.load %arg3[%c0_91, %c0_92, %c0_93] : memref<4x32x32xf32, #tpu.memory_space<vmem>>, vector<1x32x32xf32>
    %125 = vector.shape_cast %124 : vector<1x32x32xf32> to vector<32x32xf32>
    %cst_94 = arith.constant dense<0.000000e+00> : vector<2x32xf32>
    %126 = tpu.matmul %123, %125, %cst_94 {dimension_numbers = #tpu.dot_dimension_numbers<[1], [0], [0], [1], [0, 0, 1, 1], [], []>} : vector<2x32xf32>, vector<32x32xf32>, vector<2x32xf32> -> vector<2x32xf32>
    %127 = vector.extract_strided_slice %120 {offsets = [2, 0], sizes = [2, 32], strides = [1, 1]} : vector<8x32xf32> to vector<2x32xf32>
    %c1_95 = arith.constant 1 : index
    %c0_96 = arith.constant 0 : index
    %c0_97 = arith.constant 0 : index
    %128 = vector.load %arg3[%c1_95, %c0_96, %c0_97] : memref<4x32x32xf32, #tpu.memory_space<vmem>>, vector<1x32x32xf32>
    %129 = vector.shape_cast %128 : vector<1x32x32xf32> to vector<32x32xf32>
    %cst_98 = arith.constant dense<0.000000e+00> : vector<2x32xf32>
    %130 = tpu.matmul %127, %129, %cst_98 {dimension_numbers = #tpu.dot_dimension_numbers<[1], [0], [0], [1], [0, 0, 1, 1], [], []>} : vector<2x32xf32>, vector<32x32xf32>, vector<2x32xf32> -> vector<2x32xf32>
    %131 = arith.addf %126, %130 : vector<2x32xf32>
    %132 = vector.extract_strided_slice %120 {offsets = [4, 0], sizes = [2, 32], strides = [1, 1]} : vector<8x32xf32> to vector<2x32xf32>
    %c2_99 = arith.constant 2 : index
    %c0_100 = arith.constant 0 : index
    %c0_101 = arith.constant 0 : index
    %133 = vector.load %arg3[%c2_99, %c0_100, %c0_101] : memref<4x32x32xf32, #tpu.memory_space<vmem>>, vector<1x32x32xf32>
    %134 = vector.shape_cast %133 : vector<1x32x32xf32> to vector<32x32xf32>
    %cst_102 = arith.constant dense<0.000000e+00> : vector<2x32xf32>
    %135 = tpu.matmul %132, %134, %cst_102 {dimension_numbers = #tpu.dot_dimension_numbers<[1], [0], [0], [1], [0, 0, 1, 1], [], []>} : vector<2x32xf32>, vector<32x32xf32>, vector<2x32xf32> -> vector<2x32xf32>
    %136 = arith.addf %131, %135 : vector<2x32xf32>
    %137 = vector.extract_strided_slice %120 {offsets = [6, 0], sizes = [2, 32], strides = [1, 1]} : vector<8x32xf32> to vector<2x32xf32>
    %c3_103 = arith.constant 3 : index
    %c0_104 = arith.constant 0 : index
    %c0_105 = arith.constant 0 : index
    %138 = vector.load %arg3[%c3_103, %c0_104, %c0_105] : memref<4x32x32xf32, #tpu.memory_space<vmem>>, vector<1x32x32xf32>
    %139 = vector.shape_cast %138 : vector<1x32x32xf32> to vector<32x32xf32>
    %cst_106 = arith.constant dense<0.000000e+00> : vector<2x32xf32>
    %140 = tpu.matmul %137, %139, %cst_106 {dimension_numbers = #tpu.dot_dimension_numbers<[1], [0], [0], [1], [0, 0, 1, 1], [], []>} : vector<2x32xf32>, vector<32x32xf32>, vector<2x32xf32> -> vector<2x32xf32>
    %141 = arith.addf %136, %140 : vector<2x32xf32>
    %142 = vector.broadcast %121 : vector<1x32xf32> to vector<2x32xf32>
    %143 = arith.addf %141, %142 : vector<2x32xf32>
    %c0_107 = arith.constant 0 : index
    %c0_108 = arith.constant 0 : index
    %144 = vector.load %arg4[%c0_107, %c0_108] : memref<32x16xf32, #tpu.memory_space<vmem>>, vector<32x16xf32>
    %cst_109 = arith.constant dense<0.000000e+00> : vector<2x16xf32>
    %145 = tpu.matmul %143, %144, %cst_109 {dimension_numbers = #tpu.dot_dimension_numbers<[1], [0], [0], [1], [0, 0, 1, 1], [], []>} : vector<2x32xf32>, vector<32x16xf32>, vector<2x16xf32> -> vector<2x16xf32>
    %146 = vector.broadcast %122 : vector<1x16xf32> to vector<2x16xf32>
    %147 = arith.addf %145, %146 : vector<2x16xf32>
    %c0_110 = arith.constant 0 : index
    %c0_111 = arith.constant 0 : index
    %148 = vector.load %arg8[%c0_110, %c0_111] : memref<2x16xf32, #tpu.memory_space<vmem>>, vector<2x16xf32>
    tpu.vector_store %arg8[%c0_110, %c0_111], %147 {strides = array<i32>} : memref<2x16xf32, #tpu.memory_space<vmem>>, vector<2x16xf32>,
    return
  }
}

</mosaic_0001>

<llo_original>
// kernel: lenet_forward.1
$region0: #{lenet_forward.1}
  #allocation0 [shape = 'u32[]', space=smem, size = 0x4, offset = 0x4, fixed_abs, tag = 'smem constant byte address 0x4 - core index']
  #allocation1 [shape = 'u32[144,128]{1,0:T(1,128)}', space=vmem, size = 0x12000, scoped, tag = 'internal scratch']
  #allocation2 [shape = 'f32[24,48]{1,0:T(8,128)}', space=vmem, size = 0x3000, scoped, tag = 'scratch operand']
  %s0 = inlined_call_operand.vmem [shape: f32[48,140], index: 0, kind: input, shape index: {}]
  %s1 = inlined_call_operand.vmem [shape: f32[140,96], index: 1, kind: input, shape index: {}]
  %s2 = inlined_call_operand.vmem [shape: f32[5,48,64], index: 2, kind: input, shape index: {}]
  %s3 = inlined_call_operand.vmem [shape: f32[4,32,32], index: 3, kind: input, shape index: {}]
  %s4 = inlined_call_operand.vmem [shape: f32[32,16], index: 4, kind: input, shape index: {}]
  %s5 = inlined_call_operand.vmem [shape: f32[48,48], index: 5, kind: input, shape index: {}]
  %s6 = inlined_call_operand.vmem [shape: f32[32,32], index: 6, kind: input, shape index: {}]
  %s7 = inlined_call_operand.vmem [shape: f32[8,48], index: 7, kind: input, shape index: {}]
  %s8 = inlined_call_operand.hbm [shape: f32[2,16], index: 8, kind: output, shape index: {}]
  %s9 = sld [smem:[#allocation0]]
  $region42: #{lenet_forward.1} parent=0
    _
  %s11 = ssub.s32 1, %s9
  %s12 = scalar_select 0, %s11, %s9
  $region1: #{lenet_forward.1} parent=0
    #allocation3 [shape = 'u8[1024]{0}', space=vmem, size = 0x400, scoped, tag = 'output window, operand 0, single buffered']
    #allocation4 [shape = 's32[1]{0}', space=sflag, size = 0x4, scoped, tag = 'scoped memory for lenet_forward.1']
    %13 = vsyncpa [#allocation4], 0
    // Predicated region
    $region2: #{lenet_forward.1} parent=1 // pred_check
      _
    $region3: #{lenet_forward.1} parent=1 // pred_check_branch
      %15 = sbr.rel (0) target = $region5
    $region4: #{lenet_forward.1} parent=1 // pred_region
      _
    $region5: #{lenet_forward.1} parent=1 // pred_fallthru
      _
    // Predicated region
    $region6: #{lenet_forward.1} parent=1 // pred_check
      _
    $region7: #{lenet_forward.1} parent=1 // pred_check_branch
      %17 = sbr.rel (0) target = $region9
    $region8: #{lenet_forward.1} parent=1 // pred_region
      _
    $region9: #{lenet_forward.1} parent=1 // pred_fallthru
      _
    // Predicated region
    $region10: #{lenet_forward.1} parent=1 // pred_check
      _
    $region11: #{lenet_forward.1} parent=1 // pred_check_branch
      %19 = sbr.rel (0) target = $region13
    $region12: #{lenet_forward.1} parent=1 // pred_region
      _
    $region13: #{lenet_forward.1} parent=1 // pred_fallthru
      _
    // Predicated region
    $region14: #{lenet_forward.1} parent=1 // pred_check
      _
    $region15: #{lenet_forward.1} parent=1 // pred_check_branch
      %21 = sbr.rel (0) target = $region17
    $region16: #{lenet_forward.1} parent=1 // pred_region
      _
    $region17: #{lenet_forward.1} parent=1 // pred_fallthru
      _
    // Predicated region
    $region18: #{lenet_forward.1} parent=1 // pred_check
      _
    $region19: #{lenet_forward.1} parent=1 // pred_check_branch
      %23 = sbr.rel (0) target = $region21
    $region20: #{lenet_forward.1} parent=1 // pred_region
      _
    $region21: #{lenet_forward.1} parent=1 // pred_fallthru
      _
    // Predicated region
    $region22: #{lenet_forward.1} parent=1 // pred_check
      _
    $region23: #{lenet_forward.1} parent=1 // pred_check_branch
      %25 = sbr.rel (0) target = $region25
    $region24: #{lenet_forward.1} parent=1 // pred_region
      _
    $region25: #{lenet_forward.1} parent=1 // pred_fallthru
      _
    // Predicated region
    $region26: #{lenet_forward.1} parent=1 // pred_check
      _
    $region27: #{lenet_forward.1} parent=1 // pred_check_branch
      %27 = sbr.rel (0) target = $region29
    $region28: #{lenet_forward.1} parent=1 // pred_region
      _
    $region29: #{lenet_forward.1} parent=1 // pred_fallthru
      _
    // Predicated region
    $region30: #{lenet_forward.1} parent=1 // pred_check
      _
    $region31: #{lenet_forward.1} parent=1 // pred_check_branch
      %29 = sbr.rel (0) target = $region33
    $region32: #{lenet_forward.1} parent=1 // pred_region
      _
    $region33: #{lenet_forward.1} parent=1 // pred_fallthru
      _
    %v30 = vld [vmem:[%s0] sm:$0xff]
    %v31 = vld [vmem:[%s0 + $0x8] sm:$0xff]
    %v32 = vld [vmem:[%s0 + $0x10] sm:$0xff]
    %v33 = vld [vmem:[%s0 + $0x18] sm:$0xff]
    %v34 = vld [vmem:[%s0 + $0x20] sm:$0xff]
    %v35 = vld [vmem:[%s0 + $0x28] sm:$0xff]
    %v36 = vld [vmem:[%s0 + $0x30] sm:$0xff]
    %v37 = vld [vmem:[%s0 + $0x38] sm:$0xff]
    %v38 = vld [vmem:[%s0 + $0x40] sm:$0xff]
    %v39 = vld [vmem:[%s0 + $0x48] sm:$0xff]
    %v40 = vld [vmem:[%s0 + $0x50] sm:$0xff]
    %v41 = vld [vmem:[%s0 + $0x58] sm:$0xff]
    %v42 = vld [vmem:[%s1] sm:$0xff]
    %v43 = vld [vmem:[%s1 + $0x8] sm:$0xff]
    %v44 = vld [vmem:[%s1 + $0x10] sm:$0xff]
    %v45 = vld [vmem:[%s1 + $0x18] sm:$0xff]
    %v46 = vld [vmem:[%s1 + $0x20] sm:$0xff]
    %v47 = vld [vmem:[%s1 + $0x28] sm:$0xff]
    %v48 = vld [vmem:[%s1 + $0x30] sm:$0xff]
    %v49 = vld [vmem:[%s1 + $0x38] sm:$0xff]
    %v50 = vld [vmem:[%s1 + $0x40] sm:$0xff]
    %v51 = vld [vmem:[%s1 + $0x48] sm:$0xff]
    %v52 = vld [vmem:[%s1 + $0x50] sm:$0xff]
    %v53 = vld [vmem:[%s1 + $0x58] sm:$0xff]
    %v54 = vld [vmem:[%s1 + $0x60] sm:$0xff]
    %v55 = vld [vmem:[%s1 + $0x68] sm:$0xff]
    %v56 = vld [vmem:[%s1 + $0x70] sm:$0xff]
    %v57 = vld [vmem:[%s1 + $0x78] sm:$0xff]
    %v58 = vld [vmem:[%s1 + $0x80] sm:$0xff]
    %v59 = vld [vmem:[%s1 + $0x88] sm:$0xf]
    %vm60 = vcmask 97280
    %v62 = vsel %vm60, %v31, 0
    %v65 = vsel %vm60, %v33, 0
    %v68 = vsel %vm60, %v35, 0
    %v71 = vsel %vm60, %v37, 0
    %v74 = vsel %vm60, %v39, 0
    %v77 = vsel %vm60, %v41, 0
    %vm79 = vcmask 1043456
    %v81 = vsel %vm79, %v59, 0
    %83 = vmatprep.subr.mxu0 0.0
    %84 = vmatpush1.msra.mxu0 %v42
    %85 = vmatprep.subr.mxu0 0.0
    %86 = vmatpush1.msra.mxu0 %v43
    %87 = vmatprep.subr.mxu0 0.0
    %88 = vmatpush1.msra.mxu0 %v44
    %89 = vmatprep.subr.mxu0 0.0
    %90 = vmatpush1.msra.mxu0 %v45
    %91 = vmatprep.subr.mxu0 0.0
    %92 = vmatpush1.msra.mxu0 %v46
    %93 = vmatprep.subr.mxu0 0.0
    %94 = vmatpush1.msra.mxu0 %v47
    %95 = vmatprep.subr.mxu0 0.0
    %96 = vmatpush1.msra.mxu0 %v48
    %97 = vmatprep.subr.mxu0 0.0
    %98 = vmatpush1.msra.mxu0 %v49
    %99 = vmatprep.subr.mxu0 0.0
    %100 = vmatpush1.msra.mxu0 %v50
    %101 = vmatprep.subr.mxu0 0.0
    %102 = vmatpush1.msra.mxu0 %v51
    %103 = vmatprep.subr.mxu0 0.0
    %104 = vmatpush1.msra.mxu0 %v52
    %105 = vmatprep.subr.mxu0 0.0
    %106 = vmatpush1.msra.mxu0 %v53
    %107 = vmatprep.subr.mxu0 0.0
    %108 = vmatpush1.msra.mxu0 %v54
    %109 = vmatprep.subr.mxu0 0.0
    %110 = vmatpush1.msra.mxu0 %v55
    %111 = vmatprep.subr.mxu0 0.0
    %112 = vmatpush1.msra.mxu0 %v56
    %113 = vmatprep.subr.mxu0 0.0
    %114 = vmatpush1.msra.mxu0 %v57
    %115 = vmatprep.subr.mxu0 0.0
    %116 = vmatpush1.msra.mxu0 %v58
    %117 = vmatprep.subr.mxu0 0.0
    %118 = vmatpush1.msra.mxu0 %v81
    %119 = vmatprep.subr.mxu0 0.0
    %120 = vmatpush1.msra.mxu0 0.0
    %121 = vmatprep.subr.mxu0 0.0
    %122 = vmatpush1.msra.mxu0 0.0
    %123 = vmatprep.subr.mxu0 0.0
    %124 = vmatpush1.msra.mxu0 0.0
    %125 = vmatprep.subr.mxu0 0.0
    %126 = vmatpush1.msra.mxu0 0.0
    %127 = vmatprep.subr.mxu0 0.0
    %128 = vmatpush1.msra.mxu0 0.0
    %129 = vmatprep.subr.mxu0 0.0
    %130 = vmatpush1.msra.mxu0 0.0
    %131 = vmatprep.subr.mxu0 0.0
    %132 = vmatpush1.msra.mxu0 0.0
    %133 = vmatprep.subr.mxu0 0.0
    %134 = vmatpush1.msra.mxu0 0.0
    %135 = vmatprep.subr.mxu0 0.0
    %136 = vmatpush1.msra.mxu0 0.0
    %137 = vmatprep.subr.mxu0 0.0
    %138 = vmatpush1.msra.mxu0 0.0
    %139 = vmatprep.subr.mxu0 0.0
    %140 = vmatpush1.msra.mxu0 0.0
    %141 = vmatprep.subr.mxu0 0.0
    %142 = vmatpush1.msra.mxu0 0.0
    %143 = vmatprep.subr.mxu0 0.0
    %144 = vmatpush1.msra.mxu0 0.0
    %145 = vmatprep.subr.mxu0 0.0
    %146 = vmatpush1.msra.mxu0 0.0
    %147 = vmatprep.mubr.f32.mxu0 %v62
    %148 = vmatmul.mubr.f32.gmra.mrb[0].mxu0 %v30
    %v149 = vpop.f32.mrb[0].mxu0
    %v150 = vadd.f32 0.0, %v149
    %v151 = vpop.f32.mrb[0].mxu0
    %152 = vmatprep.mubr.f32.mxu0 %v65
    %153 = vmatmul.mubr.f32.gmra.mrb[0].mxu0 %v32
    %v154 = vpop.f32.mrb[0].mxu0
    %v155 = vadd.f32 0.0, %v154
    %v156 = vpop.f32.mrb[0].mxu0
    %157 = vmatprep.mubr.f32.mxu0 %v68
    %158 = vmatmul.mubr.f32.gmra.mrb[0].mxu0 %v34
    %v159 = vpop.f32.mrb[0].mxu0
    %v160 = vadd.f32 0.0, %v159
    %v161 = vpop.f32.mrb[0].mxu0
    %162 = vmatprep.mubr.f32.mxu0 %v71
    %163 = vmatmul.mubr.f32.gmra.mrb[0].mxu0 %v36
    %v164 = vpop.f32.mrb[0].mxu0
    %v165 = vadd.f32 0.0, %v164
    %v166 = vpop.f32.mrb[0].mxu0
    %167 = vmatprep.mubr.f32.mxu0 %v74
    %168 = vmatmul.mubr.f32.gmra.mrb[0].mxu0 %v38
    %v169 = vpop.f32.mrb[0].mxu0
    %v170 = vadd.f32 0.0, %v169
    %v171 = vpop.f32.mrb[0].mxu0
    %172 = vmatprep.mubr.f32.mxu0 %v77
    %173 = vmatmul.mubr.f32.gmra.mrb[0].mxu0 %v40
    %v174 = vpop.f32.mrb[0].mxu0
    %v175 = vadd.f32 0.0, %v174
    %v176 = vpop.f32.mrb[0].mxu0
    %177 = vdwg.mxu0
    %184 = vrot.lane.b32.xlu0 %v150, 80
    %v185 = vpop.permute.xlu0 %184
    %186 = vrot.lane.b32.xlu0 %v155, 80
    %v187 = vpop.permute.xlu0 %186
    %188 = vrot.lane.b32.xlu0 %v160, 80
    %v189 = vpop.permute.xlu0 %188
    %190 = vrot.lane.b32.xlu0 %v165, 80
    %v191 = vpop.permute.xlu0 %190
    %192 = vrot.lane.b32.xlu0 %v170, 80
    %v193 = vpop.permute.xlu0 %192
    %194 = vrot.lane.b32.xlu0 %v175, 80
    %v195 = vpop.permute.xlu0 %194
    %v202 = vmax.f32 %v150, %v185
    %v203 = vmax.f32 %v155, %v187
    %v204 = vmax.f32 %v160, %v189
    %v205 = vmax.f32 %v165, %v191
    %v206 = vmax.f32 %v170, %v193
    %v207 = vmax.f32 %v175, %v195
    %v208 = vmax.f32 %v202, %v205
    %v209 = vmax.f32 %v203, %v206
    %v210 = vmax.f32 %v204, %v207
    %v211 = vld [vmem:[%s7] sm:$0x1]
    %v212 = vld [vmem:[%s7 + $0x1] sm:$0x1]
    %v213 = vld [vmem:[%s7 + $0x2] sm:$0x1]
    %v214 = vlaneseq
    %v215 = vshrl.u32 %v214, 7
    %v216 = vsub.s32 0, %v215
    %v217 = vrot.slane %v211, %v216
    %v218 = vadd.f32 %v208, %v217
    %v219 = vadd.f32 %v209, %v217
    %v220 = vadd.f32 %v210, %v217
    %v221 = vmax.f32 %v218, 0.0
    %v222 = vmax.f32 %v219, 0.0
    %v223 = vmax.f32 %v220, 0.0
    %vm224 = vcmask 392192
    %v225 = vsel %vm224, %v221, 0.0
    %v226 = vsel %vm224, %v222, 0.0
    %v227 = vadd.f32 %v225, %v226
    %v228 = vsel %vm224, %v223, 0.0
    %v229 = vadd.f32 %v227, %v228
    %v230 = vrot.slane %v229, 4
    %v231 = vadd.f32 %v229, %v230
    %v232 = vrot.slane %v231, 2
    %v233 = vadd.f32 %v231, %v232
    %v234 = vrot.slane %v233, 1
    %v235 = vadd.f32 %v233, %v234
    %v236 = vmul.f32 %v221, %v221
    %v237 = vmul.f32 %v222, %v222
    %v238 = vmul.f32 %v223, %v223
    %v239 = vsel %vm224, %v236, 0.0
    %v240 = vsel %vm224, %v237, 0.0
    %v241 = vadd.f32 %v239, %v240
    %v242 = vsel %vm224, %v238, 0.0
    %v243 = vadd.f32 %v241, %v242
    %v244 = vrot.slane %v243, 4
    %v245 = vadd.f32 %v243, %v244
    %v246 = vrot.slane %v245, 2
    %v247 = vadd.f32 %v245, %v246
    %v248 = vrot.slane %v247, 1
    %v249 = vadd.f32 %v247, %v248
    %v250 = vld [vmem:[%s5] sm:$0xff]
    %v251 = vld [vmem:[%s5 + $0x8] sm:$0xff]
    %v252 = vld [vmem:[%s5 + $0x10] sm:$0xff]
    %v253 = vld [vmem:[%s5 + $0x18] sm:$0xff]
    %v254 = vld [vmem:[%s5 + $0x20] sm:$0xff]
    %v255 = vld [vmem:[%s5 + $0x28] sm:$0xff]
    %v257 = vsel %vm224, %v235, 0
    %259 = vmatprep.subr.mxu0 0.0
    %260 = vmatpush1.msra.mxu0 %v250
    %261 = vmatprep.subr.mxu0 0.0
    %262 = vmatpush1.msra.mxu0 %v251
    %263 = vmatprep.subr.mxu0 0.0
    %264 = vmatpush1.msra.mxu0 %v252
    %265 = vmatprep.subr.mxu0 0.0
    %266 = vmatpush1.msra.mxu0 %v253
    %267 = vmatprep.subr.mxu0 0.0
    %268 = vmatpush1.msra.mxu0 %v254
    %269 = vmatprep.subr.mxu0 0.0
    %270 = vmatpush1.msra.mxu0 %v255
    %271 = vmatprep.subr.mxu0 0.0
    %272 = vmatpush1.msra.mxu0 0.0
    %273 = vmatprep.subr.mxu0 0.0
    %274 = vmatpush1.msra.mxu0 0.0
    %275 = vmatprep.subr.mxu0 0.0
    %276 = vmatpush1.msra.mxu0 0.0
    %277 = vmatprep.subr.mxu0 0.0
    %278 = vmatpush1.msra.mxu0 0.0
    %279 = vmatprep.subr.mxu0 0.0
    %280 = vmatpush1.msra.mxu0 0.0
    %281 = vmatprep.subr.mxu0 0.0
    %282 = vmatpush1.msra.mxu0 0.0
    %283 = vmatprep.subr.mxu0 0.0
    %284 = vmatpush1.msra.mxu0 0.0
    %285 = vmatprep.subr.mxu0 0.0
    %286 = vmatpush1.msra.mxu0 0.0
    %287 = vmatprep.subr.mxu0 0.0
    %288 = vmatpush1.msra.mxu0 0.0
    %289 = vmatprep.subr.mxu0 0.0
    %290 = vmatpush1.msra.mxu0 0.0
    %291 = vmatprep.subr.mxu0 0.0
    %292 = vmatpush1.msra.mxu0 0.0
    %293 = vmatprep.subr.mxu0 0.0
    %294 = vmatpush1.msra.mxu0 0.0
    %295 = vmatprep.subr.mxu0 0.0
    %296 = vmatpush1.msra.mxu0 0.0
    %297 = vmatprep.subr.mxu0 0.0
    %298 = vmatpush1.msra.mxu0 0.0
    %299 = vmatprep.subr.mxu0 0.0
    %300 = vmatpush1.msra.mxu0 0.0
    %301 = vmatprep.subr.mxu0 0.0
    %302 = vmatpush1.msra.mxu0 0.0
    %303 = vmatprep.subr.mxu0 0.0
    %304 = vmatpush1.msra.mxu0 0.0
    %305 = vmatprep.subr.mxu0 0.0
    %306 = vmatpush1.msra.mxu0 0.0
    %307 = vmatprep.subr.mxu0 0.0
    %308 = vmatpush1.msra.mxu0 0.0
    %309 = vmatprep.subr.mxu0 0.0
    %310 = vmatpush1.msra.mxu0 0.0
    %311 = vmatprep.subr.mxu0 0.0
    %312 = vmatpush1.msra.mxu0 0.0
    %313 = vmatprep.subr.mxu0 0.0
    %314 = vmatpush1.msra.mxu0 0.0
    %315 = vmatprep.subr.mxu0 0.0
    %316 = vmatpush1.msra.mxu0 0.0
    %317 = vmatprep.subr.mxu0 0.0
    %318 = vmatpush1.msra.mxu0 0.0
    %319 = vmatprep.subr.mxu0 0.0
    %320 = vmatpush1.msra.mxu0 0.0
    %321 = vmatprep.subr.mxu0 0.0
    %322 = vmatpush1.msra.mxu0 0.0
    %323 = vmatprep.mubr.f32.mxu0 0.0
    %324 = vmatmul.mubr.f32.gmra.mrb[0].mxu0 %v257
    %v325 = vpop.f32.mrb[0].mxu0
    %v326 = vadd.f32 0.0, %v325
    %v327 = vpop.f32.mrb[0].mxu0
    %328 = vdwg.mxu0
    %v330 = vsel %vm224, %v249, 0
    %332 = vmatprep.subr.mxu0 0.0
    %333 = vmatpush1.msra.mxu0 %v250
    %334 = vmatprep.subr.mxu0 0.0
    %335 = vmatpush1.msra.mxu0 %v251
    %336 = vmatprep.subr.mxu0 0.0
    %337 = vmatpush1.msra.mxu0 %v252
    %338 = vmatprep.subr.mxu0 0.0
    %339 = vmatpush1.msra.mxu0 %v253
    %340 = vmatprep.subr.mxu0 0.0
    %341 = vmatpush1.msra.mxu0 %v254
    %342 = vmatprep.subr.mxu0 0.0
    %343 = vmatpush1.msra.mxu0 %v255
    %344 = vmatprep.subr.mxu0 0.0
    %345 = vmatpush1.msra.mxu0 0.0
    %346 = vmatprep.subr.mxu0 0.0
    %347 = vmatpush1.msra.mxu0 0.0
    %348 = vmatprep.subr.mxu0 0.0
    %349 = vmatpush1.msra.mxu0 0.0
    %350 = vmatprep.subr.mxu0 0.0
    %351 = vmatpush1.msra.mxu0 0.0
    %352 = vmatprep.subr.mxu0 0.0
    %353 = vmatpush1.msra.mxu0 0.0
    %354 = vmatprep.subr.mxu0 0.0
    %355 = vmatpush1.msra.mxu0 0.0
    %356 = vmatprep.subr.mxu0 0.0
    %357 = vmatpush1.msra.mxu0 0.0
    %358 = vmatprep.subr.mxu0 0.0
    %359 = vmatpush1.msra.mxu0 0.0
    %360 = vmatprep.subr.mxu0 0.0
    %361 = vmatpush1.msra.mxu0 0.0
    %362 = vmatprep.subr.mxu0 0.0
    %363 = vmatpush1.msra.mxu0 0.0
    %364 = vmatprep.subr.mxu0 0.0
    %365 = vmatpush1.msra.mxu0 0.0
    %366 = vmatprep.subr.mxu0 0.0
    %367 = vmatpush1.msra.mxu0 0.0
    %368 = vmatprep.subr.mxu0 0.0
    %369 = vmatpush1.msra.mxu0 0.0
    %370 = vmatprep.subr.mxu0 0.0
    %371 = vmatpush1.msra.mxu0 0.0
    %372 = vmatprep.subr.mxu0 0.0
    %373 = vmatpush1.msra.mxu0 0.0
    %374 = vmatprep.subr.mxu0 0.0
    %375 = vmatpush1.msra.mxu0 0.0
    %376 = vmatprep.subr.mxu0 0.0
    %377 = vmatpush1.msra.mxu0 0.0
    %378 = vmatprep.subr.mxu0 0.0
    %379 = vmatpush1.msra.mxu0 0.0
    %380 = vmatprep.subr.mxu0 0.0
    %381 = vmatpush1.msra.mxu0 0.0
    %382 = vmatprep.subr.mxu0 0.0
    %383 = vmatpush1.msra.mxu0 0.0
    %384 = vmatprep.subr.mxu0 0.0
    %385 = vmatpush1.msra.mxu0 0.0
    %386 = vmatprep.subr.mxu0 0.0
    %387 = vmatpush1.msra.mxu0 0.0
    %388 = vmatprep.subr.mxu0 0.0
    %389 = vmatpush1.msra.mxu0 0.0
    %390 = vmatprep.subr.mxu0 0.0
    %391 = vmatpush1.msra.mxu0 0.0
    %392 = vmatprep.subr.mxu0 0.0
    %393 = vmatpush1.msra.mxu0 0.0
    %394 = vmatprep.subr.mxu0 0.0
    %395 = vmatpush1.msra.mxu0 0.0
    %396 = vmatprep.mubr.f32.mxu0 0.0
    %397 = vmatmul.mubr.f32.gmra.mrb[0].mxu0 %v330
    %v398 = vpop.f32.mrb[0].mxu0
    %v399 = vadd.f32 0.0, %v398
    %v400 = vpop.f32.mrb[0].mxu0
    %401 = vdwg.mxu0
    %v402 = vmul.f32 %v326, %v326
    %v403 = vsub.f32 %v399, %v402
    %v404 = vadd.f32 %v403, 1e-05
    %v405 = vrsqrt.pop %v404
    %v406 = vmul.f32 %v212, %v405
    %v407 = vlaneseq
    %v408 = vshrl.u32 %v407, 7
    %v409 = vsub.s32 0, %v408
    %v410 = vrot.slane %v326, %v409
    %v411 = vsub.f32 %v221, %v410
    %v412 = vsub.f32 %v222, %v410
    %v413 = vsub.f32 %v223, %v410
    %v414 = vlaneseq
    %v415 = vshrl.u32 %v414, 7
    %v416 = vsub.s32 0, %v415
    %v417 = vrot.slane %v406, %v416
    %v418 = vmul.f32 %v411, %v417
    %v419 = vmul.f32 %v412, %v417
    %v420 = vmul.f32 %v413, %v417
    %v421 = vlaneseq
    %v422 = vshrl.u32 %v421, 7
    %v423 = vsub.s32 0, %v422
    %v424 = vrot.slane %v213, %v423
    %v425 = vadd.f32 %v418, %v424
    %v426 = vadd.f32 %v419, %v424
    %v427 = vadd.f32 %v420, %v424
    %428 = vst.msk [vmem:[#allocation2] sm:$0xff] %vm224, %v425
    %429 = vst.msk [vmem:[#allocation2 + $0x8] sm:$0xff] %vm224, %v426
    %430 = vst.msk [vmem:[#allocation2 + $0x10] sm:$0xff] %vm224, %v427
    %v431 = vld [vmem:[#allocation2] sm:$0xff]
    %v432 = vld [vmem:[%s2] sm:$0xff]
    %v433 = vld [vmem:[%s2 + $0x8] sm:$0xff]
    %v434 = vld [vmem:[%s2 + $0x10] sm:$0xff]
    %v435 = vld [vmem:[%s2 + $0x18] sm:$0xff]
    %v436 = vld [vmem:[%s2 + $0x20] sm:$0xff]
    %v437 = vld [vmem:[%s2 + $0x28] sm:$0xff]
    %v438 = vld [vmem:[#allocation2 + $0xc] sm:$0xff]
    %s439 = scalar_lea.vmem %s2, 48
    %v440 = vld [vmem:[%s439] sm:$0xff]
    %v441 = vld [vmem:[%s439 + $0x8] sm:$0xff]
    %v442 = vld [vmem:[%s439 + $0x10] sm:$0xff]
    %v443 = vld [vmem:[%s439 + $0x18] sm:$0xff]
    %v444 = vld [vmem:[%s439 + $0x20] sm:$0xff]
    %v445 = vld [vmem:[%s439 + $0x28] sm:$0xff]
    %v447 = vsel %vm224, %v438, 0
    %449 = vmatprep.subr.mxu0 0.0
    %450 = vmatpush1.msra.mxu0 %v440
    %451 = vmatprep.subr.mxu0 0.0
    %452 = vmatpush1.msra.mxu0 %v441
    %453 = vmatprep.subr.mxu0 0.0
    %454 = vmatpush1.msra.mxu0 %v442
    %455 = vmatprep.subr.mxu0 0.0
    %456 = vmatpush1.msra.mxu0 %v443
    %457 = vmatprep.subr.mxu0 0.0
    %458 = vmatpush1.msra.mxu0 %v444
    %459 = vmatprep.subr.mxu0 0.0
    %460 = vmatpush1.msra.mxu0 %v445
    %461 = vmatprep.subr.mxu0 0.0
    %462 = vmatpush1.msra.mxu0 0.0
    %463 = vmatprep.subr.mxu0 0.0
    %464 = vmatpush1.msra.mxu0 0.0
    %465 = vmatprep.subr.mxu0 0.0
    %466 = vmatpush1.msra.mxu0 0.0
    %467 = vmatprep.subr.mxu0 0.0
    %468 = vmatpush1.msra.mxu0 0.0
    %469 = vmatprep.subr.mxu0 0.0
    %470 = vmatpush1.msra.mxu0 0.0
    %471 = vmatprep.subr.mxu0 0.0
    %472 = vmatpush1.msra.mxu0 0.0
    %473 = vmatprep.subr.mxu0 0.0
    %474 = vmatpush1.msra.mxu0 0.0
    %475 = vmatprep.subr.mxu0 0.0
    %476 = vmatpush1.msra.mxu0 0.0
    %477 = vmatprep.subr.mxu0 0.0
    %478 = vmatpush1.msra.mxu0 0.0
    %479 = vmatprep.subr.mxu0 0.0
    %480 = vmatpush1.msra.mxu0 0.0
    %481 = vmatprep.subr.mxu0 0.0
    %482 = vmatpush1.msra.mxu0 0.0
    %483 = vmatprep.subr.mxu0 0.0
    %484 = vmatpush1.msra.mxu0 0.0
    %485 = vmatprep.subr.mxu0 0.0
    %486 = vmatpush1.msra.mxu0 0.0
    %487 = vmatprep.subr.mxu0 0.0
    %488 = vmatpush1.msra.mxu0 0.0
    %489 = vmatprep.subr.mxu0 0.0
    %490 = vmatpush1.msra.mxu0 0.0
    %491 = vmatprep.subr.mxu0 0.0
    %492 = vmatpush1.msra.mxu0 0.0
    %493 = vmatprep.subr.mxu0 0.0
    %494 = vmatpush1.msra.mxu0 0.0
    %495 = vmatprep.subr.mxu0 0.0
    %496 = vmatpush1.msra.mxu0 0.0
    %497 = vmatprep.subr.mxu0 0.0
    %498 = vmatpush1.msra.mxu0 0.0
    %499 = vmatprep.subr.mxu0 0.0
    %500 = vmatpush1.msra.mxu0 0.0
    %501 = vmatprep.subr.mxu0 0.0
    %502 = vmatpush1.msra.mxu0 0.0
    %503 = vmatprep.subr.mxu0 0.0
    %504 = vmatpush1.msra.mxu0 0.0
    %505 = vmatprep.subr.mxu0 0.0
    %506 = vmatpush1.msra.mxu0 0.0
    %507 = vmatprep.subr.mxu0 0.0
    %508 = vmatpush1.msra.mxu0 0.0
    %509 = vmatprep.subr.mxu0 0.0
    %510 = vmatpush1.msra.mxu0 0.0
    %511 = vmatprep.subr.mxu0 0.0
    %512 = vmatpush1.msra.mxu0 0.0
    %513 = vmatprep.mubr.f32.mxu0 0.0
    %514 = vmatmul.mubr.f32.gmra.mrb[0].mxu0 %v447
    %v515 = vpop.f32.mrb[0].mxu0
    %v516 = vadd.f32 0.0, %v515
    %v517 = vpop.f32.mrb[0].mxu0
    %518 = vdwg.mxu0
    %v520 = vsel %vm224, %v431, 0
    %522 = vmatprep.subr.mxu0 0.0
    %523 = vmatpush1.msra.mxu0 %v432
    %524 = vmatprep.subr.mxu0 0.0
    %525 = vmatpush1.msra.mxu0 %v433
    %526 = vmatprep.subr.mxu0 0.0
    %527 = vmatpush1.msra.mxu0 %v434
    %528 = vmatprep.subr.mxu0 0.0
    %529 = vmatpush1.msra.mxu0 %v435
    %530 = vmatprep.subr.mxu0 0.0
    %531 = vmatpush1.msra.mxu0 %v436
    %532 = vmatprep.subr.mxu0 0.0
    %533 = vmatpush1.msra.mxu0 %v437
    %534 = vmatprep.subr.mxu0 0.0
    %535 = vmatpush1.msra.mxu0 0.0
    %536 = vmatprep.subr.mxu0 0.0
    %537 = vmatpush1.msra.mxu0 0.0
    %538 = vmatprep.subr.mxu0 0.0
    %539 = vmatpush1.msra.mxu0 0.0
    %540 = vmatprep.subr.mxu0 0.0
    %541 = vmatpush1.msra.mxu0 0.0
    %542 = vmatprep.subr.mxu0 0.0
    %543 = vmatpush1.msra.mxu0 0.0
    %544 = vmatprep.subr.mxu0 0.0
    %545 = vmatpush1.msra.mxu0 0.0
    %546 = vmatprep.subr.mxu0 0.0
    %547 = vmatpush1.msra.mxu0 0.0
    %548 = vmatprep.subr.mxu0 0.0
    %549 = vmatpush1.msra.mxu0 0.0
    %550 = vmatprep.subr.mxu0 0.0
    %551 = vmatpush1.msra.mxu0 0.0
    %552 = vmatprep.subr.mxu0 0.0
    %553 = vmatpush1.msra.mxu0 0.0
    %554 = vmatprep.subr.mxu0 0.0
    %555 = vmatpush1.msra.mxu0 0.0
    %556 = vmatprep.subr.mxu0 0.0
    %557 = vmatpush1.msra.mxu0 0.0
    %558 = vmatprep.subr.mxu0 0.0
    %559 = vmatpush1.msra.mxu0 0.0
    %560 = vmatprep.subr.mxu0 0.0
    %561 = vmatpush1.msra.mxu0 0.0
    %562 = vmatprep.subr.mxu0 0.0
    %563 = vmatpush1.msra.mxu0 0.0
    %564 = vmatprep.subr.mxu0 0.0
    %565 = vmatpush1.msra.mxu0 0.0
    %566 = vmatprep.subr.mxu0 0.0
    %567 = vmatpush1.msra.mxu0 0.0
    %568 = vmatprep.subr.mxu0 0.0
    %569 = vmatpush1.msra.mxu0 0.0
    %570 = vmatprep.subr.mxu0 0.0
    %571 = vmatpush1.msra.mxu0 0.0
    %572 = vmatprep.subr.mxu0 0.0
    %573 = vmatpush1.msra.mxu0 0.0
    %574 = vmatprep.subr.mxu0 0.0
    %575 = vmatpush1.msra.mxu0 0.0
    %576 = vmatprep.subr.mxu0 0.0
    %577 = vmatpush1.msra.mxu0 0.0
    %578 = vmatprep.subr.mxu0 0.0
    %579 = vmatpush1.msra.mxu0 0.0
    %580 = vmatprep.subr.mxu0 0.0
    %581 = vmatpush1.msra.mxu0 0.0
    %582 = vmatprep.subr.mxu0 0.0
    %583 = vmatpush1.msra.mxu0 0.0
    %584 = vmatprep.subr.mxu0 0.0
    %585 = vmatpush1.msra.mxu0 0.0
    %586 = vmatprep.mubr.f32.mxu0 0.0
    %587 = vmatmul.mubr.f32.gmra.mrb[0].mxu0 %v520
    %v588 = vpop.f32.mrb[0].mxu0
    %v589 = vadd.f32 %v516, %v588
    %v590 = vpop.f32.mrb[0].mxu0
    %591 = vdwg.mxu0
    %v592 = vld [vmem:[#allocation2 + $0x2] sm:$0xff]
    %s593 = scalar_lea.vmem %s2, 96
    %v594 = vld [vmem:[%s593] sm:$0xff]
    %v595 = vld [vmem:[%s593 + $0x8] sm:$0xff]
    %v596 = vld [vmem:[%s593 + $0x10] sm:$0xff]
    %v597 = vld [vmem:[%s593 + $0x18] sm:$0xff]
    %v598 = vld [vmem:[%s593 + $0x20] sm:$0xff]
    %v599 = vld [vmem:[%s593 + $0x28] sm:$0xff]
    %v601 = vsel %vm224, %v592, 0
    %603 = vmatprep.subr.mxu0 0.0
    %604 = vmatpush1.msra.mxu0 %v594
    %605 = vmatprep.subr.mxu0 0.0
    %606 = vmatpush1.msra.mxu0 %v595
    %607 = vmatprep.subr.mxu0 0.0
    %608 = vmatpush1.msra.mxu0 %v596
    %609 = vmatprep.subr.mxu0 0.0
    %610 = vmatpush1.msra.mxu0 %v597
    %611 = vmatprep.subr.mxu0 0.0
    %612 = vmatpush1.msra.mxu0 %v598
    %613 = vmatprep.subr.mxu0 0.0
    %614 = vmatpush1.msra.mxu0 %v599
    %615 = vmatprep.subr.mxu0 0.0
    %616 = vmatpush1.msra.mxu0 0.0
    %617 = vmatprep.subr.mxu0 0.0
    %618 = vmatpush1.msra.mxu0 0.0
    %619 = vmatprep.subr.mxu0 0.0
    %620 = vmatpush1.msra.mxu0 0.0
    %621 = vmatprep.subr.mxu0 0.0
    %622 = vmatpush1.msra.mxu0 0.0
    %623 = vmatprep.subr.mxu0 0.0
    %624 = vmatpush1.msra.mxu0 0.0
    %625 = vmatprep.subr.mxu0 0.0
    %626 = vmatpush1.msra.mxu0 0.0
    %627 = vmatprep.subr.mxu0 0.0
    %628 = vmatpush1.msra.mxu0 0.0
    %629 = vmatprep.subr.mxu0 0.0
    %630 = vmatpush1.msra.mxu0 0.0
    %631 = vmatprep.subr.mxu0 0.0
    %632 = vmatpush1.msra.mxu0 0.0
    %633 = vmatprep.subr.mxu0 0.0
    %634 = vmatpush1.msra.mxu0 0.0
    %635 = vmatprep.subr.mxu0 0.0
    %636 = vmatpush1.msra.mxu0 0.0
    %637 = vmatprep.subr.mxu0 0.0
    %638 = vmatpush1.msra.mxu0 0.0
    %639 = vmatprep.subr.mxu0 0.0
    %640 = vmatpush1.msra.mxu0 0.0
    %641 = vmatprep.subr.mxu0 0.0
    %642 = vmatpush1.msra.mxu0 0.0
    %643 = vmatprep.subr.mxu0 0.0
    %644 = vmatpush1.msra.mxu0 0.0
    %645 = vmatprep.subr.mxu0 0.0
    %646 = vmatpush1.msra.mxu0 0.0
    %647 = vmatprep.subr.mxu0 0.0
    %648 = vmatpush1.msra.mxu0 0.0
    %649 = vmatprep.subr.mxu0 0.0
    %650 = vmatpush1.msra.mxu0 0.0
    %651 = vmatprep.subr.mxu0 0.0
    %652 = vmatpush1.msra.mxu0 0.0
    %653 = vmatprep.subr.mxu0 0.0
    %654 = vmatpush1.msra.mxu0 0.0
    %655 = vmatprep.subr.mxu0 0.0
    %656 = vmatpush1.msra.mxu0 0.0
    %657 = vmatprep.subr.mxu0 0.0
    %658 = vmatpush1.msra.mxu0 0.0
    %659 = vmatprep.subr.mxu0 0.0
    %660 = vmatpush1.msra.mxu0 0.0
    %661 = vmatprep.subr.mxu0 0.0
    %662 = vmatpush1.msra.mxu0 0.0
    %663 = vmatprep.subr.mxu0 0.0
    %664 = vmatpush1.msra.mxu0 0.0
    %665 = vmatprep.subr.mxu0 0.0
    %666 = vmatpush1.msra.mxu0 0.0
    %667 = vmatprep.mubr.f32.mxu0 0.0
    %668 = vmatmul.mubr.f32.gmra.mrb[0].mxu0 %v601
    %v669 = vpop.f32.mrb[0].mxu0
    %v670 = vadd.f32 0.0, %v669
    %v671 = vpop.f32.mrb[0].mxu0
    %672 = vdwg.mxu0
    %v673 = vadd.f32 %v589, %v670
    %v674 = vld [vmem:[#allocation2 + $0xe] sm:$0xff]
    %s675 = scalar_lea.vmem %s2, 144
    %v676 = vld [vmem:[%s675] sm:$0xff]
    %v677 = vld [vmem:[%s675 + $0x8] sm:$0xff]
    %v678 = vld [vmem:[%s675 + $0x10] sm:$0xff]
    %v679 = vld [vmem:[%s675 + $0x18] sm:$0xff]
    %v680 = vld [vmem:[%s675 + $0x20] sm:$0xff]
    %v681 = vld [vmem:[%s675 + $0x28] sm:$0xff]
    %v683 = vsel %vm224, %v674, 0
    %685 = vmatprep.subr.mxu0 0.0
    %686 = vmatpush1.msra.mxu0 %v676
    %687 = vmatprep.subr.mxu0 0.0
    %688 = vmatpush1.msra.mxu0 %v677
    %689 = vmatprep.subr.mxu0 0.0
    %690 = vmatpush1.msra.mxu0 %v678
    %691 = vmatprep.subr.mxu0 0.0
    %692 = vmatpush1.msra.mxu0 %v679
    %693 = vmatprep.subr.mxu0 0.0
    %694 = vmatpush1.msra.mxu0 %v680
    %695 = vmatprep.subr.mxu0 0.0
    %696 = vmatpush1.msra.mxu0 %v681
    %697 = vmatprep.subr.mxu0 0.0
    %698 = vmatpush1.msra.mxu0 0.0
    %699 = vmatprep.subr.mxu0 0.0
    %700 = vmatpush1.msra.mxu0 0.0
    %701 = vmatprep.subr.mxu0 0.0
    %702 = vmatpush1.msra.mxu0 0.0
    %703 = vmatprep.subr.mxu0 0.0
    %704 = vmatpush1.msra.mxu0 0.0
    %705 = vmatprep.subr.mxu0 0.0
    %706 = vmatpush1.msra.mxu0 0.0
    %707 = vmatprep.subr.mxu0 0.0
    %708 = vmatpush1.msra.mxu0 0.0
    %709 = vmatprep.subr.mxu0 0.0
    %710 = vmatpush1.msra.mxu0 0.0
    %711 = vmatprep.subr.mxu0 0.0
    %712 = vmatpush1.msra.mxu0 0.0
    %713 = vmatprep.subr.mxu0 0.0
    %714 = vmatpush1.msra.mxu0 0.0
    %715 = vmatprep.subr.mxu0 0.0
    %716 = vmatpush1.msra.mxu0 0.0
    %717 = vmatprep.subr.mxu0 0.0
    %718 = vmatpush1.msra.mxu0 0.0
    %719 = vmatprep.subr.mxu0 0.0
    %720 = vmatpush1.msra.mxu0 0.0
    %721 = vmatprep.subr.mxu0 0.0
    %722 = vmatpush1.msra.mxu0 0.0
    %723 = vmatprep.subr.mxu0 0.0
    %724 = vmatpush1.msra.mxu0 0.0
    %725 = vmatprep.subr.mxu0 0.0
    %726 = vmatpush1.msra.mxu0 0.0
    %727 = vmatprep.subr.mxu0 0.0
    %728 = vmatpush1.msra.mxu0 0.0
    %729 = vmatprep.subr.mxu0 0.0
    %730 = vmatpush1.msra.mxu0 0.0
    %731 = vmatprep.subr.mxu0 0.0
    %732 = vmatpush1.msra.mxu0 0.0
    %733 = vmatprep.subr.mxu0 0.0
    %734 = vmatpush1.msra.mxu0 0.0
    %735 = vmatprep.subr.mxu0 0.0
    %736 = vmatpush1.msra.mxu0 0.0
    %737 = vmatprep.subr.mxu0 0.0
    %738 = vmatpush1.msra.mxu0 0.0
    %739 = vmatprep.subr.mxu0 0.0
    %740 = vmatpush1.msra.mxu0 0.0
    %741 = vmatprep.subr.mxu0 0.0
    %742 = vmatpush1.msra.mxu0 0.0
    %743 = vmatprep.subr.mxu0 0.0
    %744 = vmatpush1.msra.mxu0 0.0
    %745 = vmatprep.subr.mxu0 0.0
    %746 = vmatpush1.msra.mxu0 0.0
    %747 = vmatprep.subr.mxu0 0.0
    %748 = vmatpush1.msra.mxu0 0.0
    %749 = vmatprep.mubr.f32.mxu0 0.0
    %750 = vmatmul.mubr.f32.gmra.mrb[0].mxu0 %v683
    %v751 = vpop.f32.mrb[0].mxu0
    %v752 = vadd.f32 0.0, %v751
    %v753 = vpop.f32.mrb[0].mxu0
    %754 = vdwg.mxu0
    %v755 = vadd.f32 %v673, %v752
    %v756 = vld [vmem:[#allocation2 + $0x4] sm:$0xff]
    %s757 = scalar_lea.vmem %s2, 192
    %v758 = vld [vmem:[%s757] sm:$0xff]
    %v759 = vld [vmem:[%s757 + $0x8] sm:$0xff]
    %v760 = vld [vmem:[%s757 + $0x10] sm:$0xff]
    %v761 = vld [vmem:[%s757 + $0x18] sm:$0xff]
    %v762 = vld [vmem:[%s757 + $0x20] sm:$0xff]
    %v763 = vld [vmem:[%s757 + $0x28] sm:$0xff]
    %v765 = vsel %vm224, %v756, 0
    %767 = vmatprep.subr.mxu0 0.0
    %768 = vmatpush1.msra.mxu0 %v758
    %769 = vmatprep.subr.mxu0 0.0
    %770 = vmatpush1.msra.mxu0 %v759
    %771 = vmatprep.subr.mxu0 0.0
    %772 = vmatpush1.msra.mxu0 %v760
    %773 = vmatprep.subr.mxu0 0.0
    %774 = vmatpush1.msra.mxu0 %v761
    %775 = vmatprep.subr.mxu0 0.0
    %776 = vmatpush1.msra.mxu0 %v762
    %777 = vmatprep.subr.mxu0 0.0
    %778 = vmatpush1.msra.mxu0 %v763
    %779 = vmatprep.subr.mxu0 0.0
    %780 = vmatpush1.msra.mxu0 0.0
    %781 = vmatprep.subr.mxu0 0.0
    %782 = vmatpush1.msra.mxu0 0.0
    %783 = vmatprep.subr.mxu0 0.0
    %784 = vmatpush1.msra.mxu0 0.0
    %785 = vmatprep.subr.mxu0 0.0
    %786 = vmatpush1.msra.mxu0 0.0
    %787 = vmatprep.subr.mxu0 0.0
    %788 = vmatpush1.msra.mxu0 0.0
    %789 = vmatprep.subr.mxu0 0.0
    %790 = vmatpush1.msra.mxu0 0.0
    %791 = vmatprep.subr.mxu0 0.0
    %792 = vmatpush1.msra.mxu0 0.0
    %793 = vmatprep.subr.mxu0 0.0
    %794 = vmatpush1.msra.mxu0 0.0
    %795 = vmatprep.subr.mxu0 0.0
    %796 = vmatpush1.msra.mxu0 0.0
    %797 = vmatprep.subr.mxu0 0.0
    %798 = vmatpush1.msra.mxu0 0.0
    %799 = vmatprep.subr.mxu0 0.0
    %800 = vmatpush1.msra.mxu0 0.0
    %801 = vmatprep.subr.mxu0 0.0
    %802 = vmatpush1.msra.mxu0 0.0
    %803 = vmatprep.subr.mxu0 0.0
    %804 = vmatpush1.msra.mxu0 0.0
    %805 = vmatprep.subr.mxu0 0.0
    %806 = vmatpush1.msra.mxu0 0.0
    %807 = vmatprep.subr.mxu0 0.0
    %808 = vmatpush1.msra.mxu0 0.0
    %809 = vmatprep.subr.mxu0 0.0
    %810 = vmatpush1.msra.mxu0 0.0
    %811 = vmatprep.subr.mxu0 0.0
    %812 = vmatpush1.msra.mxu0 0.0
    %813 = vmatprep.subr.mxu0 0.0
    %814 = vmatpush1.msra.mxu0 0.0
    %815 = vmatprep.subr.mxu0 0.0
    %816 = vmatpush1.msra.mxu0 0.0
    %817 = vmatprep.subr.mxu0 0.0
    %818 = vmatpush1.msra.mxu0 0.0
    %819 = vmatprep.subr.mxu0 0.0
    %820 = vmatpush1.msra.mxu0 0.0
    %821 = vmatprep.subr.mxu0 0.0
    %822 = vmatpush1.msra.mxu0 0.0
    %823 = vmatprep.subr.mxu0 0.0
    %824 = vmatpush1.msra.mxu0 0.0
    %825 = vmatprep.subr.mxu0 0.0
    %826 = vmatpush1.msra.mxu0 0.0
    %827 = vmatprep.subr.mxu0 0.0
    %828 = vmatpush1.msra.mxu0 0.0
    %829 = vmatprep.subr.mxu0 0.0
    %830 = vmatpush1.msra.mxu0 0.0
    %831 = vmatprep.mubr.f32.mxu0 0.0
    %832 = vmatmul.mubr.f32.gmra.mrb[0].mxu0 %v765
    %v833 = vpop.f32.mrb[0].mxu0
    %v834 = vadd.f32 0.0, %v833
    %v835 = vpop.f32.mrb[0].mxu0
    %836 = vdwg.mxu0
    %v837 = vadd.f32 %v755, %v834
    %839 = vrot.lane.b32.xlu0 %v837, 96
    %v840 = vpop.permute.xlu0 %839
    %v842 = vmax.f32 %v837, %v840
    %843 = vmatprep.subr.mxu0 0.0
    %844 = vmatpush1.msra.mxu0 %v440
    %845 = vmatprep.subr.mxu0 0.0
    %846 = vmatpush1.msra.mxu0 %v441
    %847 = vmatprep.subr.mxu0 0.0
    %848 = vmatpush1.msra.mxu0 %v442
    %849 = vmatprep.subr.mxu0 0.0
    %850 = vmatpush1.msra.mxu0 %v443
    %851 = vmatprep.subr.mxu0 0.0
    %852 = vmatpush1.msra.mxu0 %v444
    %853 = vmatprep.subr.mxu0 0.0
    %854 = vmatpush1.msra.mxu0 %v445
    %855 = vmatprep.subr.mxu0 0.0
    %856 = vmatpush1.msra.mxu0 0.0
    %857 = vmatprep.subr.mxu0 0.0
    %858 = vmatpush1.msra.mxu0 0.0
    %859 = vmatprep.subr.mxu0 0.0
    %860 = vmatpush1.msra.mxu0 0.0
    %861 = vmatprep.subr.mxu0 0.0
    %862 = vmatpush1.msra.mxu0 0.0
    %863 = vmatprep.subr.mxu0 0.0
    %864 = vmatpush1.msra.mxu0 0.0
    %865 = vmatprep.subr.mxu0 0.0
    %866 = vmatpush1.msra.mxu0 0.0
    %867 = vmatprep.subr.mxu0 0.0
    %868 = vmatpush1.msra.mxu0 0.0
    %869 = vmatprep.subr.mxu0 0.0
    %870 = vmatpush1.msra.mxu0 0.0
    %871 = vmatprep.subr.mxu0 0.0
    %872 = vmatpush1.msra.mxu0 0.0
    %873 = vmatprep.subr.mxu0 0.0
    %874 = vmatpush1.msra.mxu0 0.0
    %875 = vmatprep.subr.mxu0 0.0
    %876 = vmatpush1.msra.mxu0 0.0
    %877 = vmatprep.subr.mxu0 0.0
    %878 = vmatpush1.msra.mxu0 0.0
    %879 = vmatprep.subr.mxu0 0.0
    %880 = vmatpush1.msra.mxu0 0.0
    %881 = vmatprep.subr.mxu0 0.0
    %882 = vmatpush1.msra.mxu0 0.0
    %883 = vmatprep.subr.mxu0 0.0
    %884 = vmatpush1.msra.mxu0 0.0
    %885 = vmatprep.subr.mxu0 0.0
    %886 = vmatpush1.msra.mxu0 0.0
    %887 = vmatprep.subr.mxu0 0.0
    %888 = vmatpush1.msra.mxu0 0.0
    %889 = vmatprep.subr.mxu0 0.0
    %890 = vmatpush1.msra.mxu0 0.0
    %891 = vmatprep.subr.mxu0 0.0
    %892 = vmatpush1.msra.mxu0 0.0
    %893 = vmatprep.subr.mxu0 0.0
    %894 = vmatpush1.msra.mxu0 0.0
    %895 = vmatprep.subr.mxu0 0.0
    %896 = vmatpush1.msra.mxu0 0.0
    %897 = vmatprep.subr.mxu0 0.0
    %898 = vmatpush1.msra.mxu0 0.0
    %899 = vmatprep.subr.mxu0 0.0
    %900 = vmatpush1.msra.mxu0 0.0
    %901 = vmatprep.subr.mxu0 0.0
    %902 = vmatpush1.msra.mxu0 0.0
    %903 = vmatprep.subr.mxu0 0.0
    %904 = vmatpush1.msra.mxu0 0.0
    %905 = vmatprep.subr.mxu0 0.0
    %906 = vmatpush1.msra.mxu0 0.0
    %907 = vmatprep.mubr.f32.mxu0 0.0
    %908 = vmatmul.mubr.f32.gmra.mrb[0].mxu0 %v601
    %v909 = vpop.f32.mrb[0].mxu0
    %v910 = vadd.f32 0.0, %v909
    %v911 = vpop.f32.mrb[0].mxu0
    %912 = vdwg.mxu0
    %913 = vmatprep.subr.mxu0 0.0
    %914 = vmatpush1.msra.mxu0 %v432
    %915 = vmatprep.subr.mxu0 0.0
    %916 = vmatpush1.msra.mxu0 %v433
    %917 = vmatprep.subr.mxu0 0.0
    %918 = vmatpush1.msra.mxu0 %v434
    %919 = vmatprep.subr.mxu0 0.0
    %920 = vmatpush1.msra.mxu0 %v435
    %921 = vmatprep.subr.mxu0 0.0
    %922 = vmatpush1.msra.mxu0 %v436
    %923 = vmatprep.subr.mxu0 0.0
    %924 = vmatpush1.msra.mxu0 %v437
    %925 = vmatprep.subr.mxu0 0.0
    %926 = vmatpush1.msra.mxu0 0.0
    %927 = vmatprep.subr.mxu0 0.0
    %928 = vmatpush1.msra.mxu0 0.0
    %929 = vmatprep.subr.mxu0 0.0
    %930 = vmatpush1.msra.mxu0 0.0
    %931 = vmatprep.subr.mxu0 0.0
    %932 = vmatpush1.msra.mxu0 0.0
    %933 = vmatprep.subr.mxu0 0.0
    %934 = vmatpush1.msra.mxu0 0.0
    %935 = vmatprep.subr.mxu0 0.0
    %936 = vmatpush1.msra.mxu0 0.0
    %937 = vmatprep.subr.mxu0 0.0
    %938 = vmatpush1.msra.mxu0 0.0
    %939 = vmatprep.subr.mxu0 0.0
    %940 = vmatpush1.msra.mxu0 0.0
    %941 = vmatprep.subr.mxu0 0.0
    %942 = vmatpush1.msra.mxu0 0.0
    %943 = vmatprep.subr.mxu0 0.0
    %944 = vmatpush1.msra.mxu0 0.0
    %945 = vmatprep.subr.mxu0 0.0
    %946 = vmatpush1.msra.mxu0 0.0
    %947 = vmatprep.subr.mxu0 0.0
    %948 = vmatpush1.msra.mxu0 0.0
    %949 = vmatprep.subr.mxu0 0.0
    %950 = vmatpush1.msra.mxu0 0.0
    %951 = vmatprep.subr.mxu0 0.0
    %952 = vmatpush1.msra.mxu0 0.0
    %953 = vmatprep.subr.mxu0 0.0
    %954 = vmatpush1.msra.mxu0 0.0
    %955 = vmatprep.subr.mxu0 0.0
    %956 = vmatpush1.msra.mxu0 0.0
    %957 = vmatprep.subr.mxu0 0.0
    %958 = vmatpush1.msra.mxu0 0.0
    %959 = vmatprep.subr.mxu0 0.0
    %960 = vmatpush1.msra.mxu0 0.0
    %961 = vmatprep.subr.mxu0 0.0
    %962 = vmatpush1.msra.mxu0 0.0
    %963 = vmatprep.subr.mxu0 0.0
    %964 = vmatpush1.msra.mxu0 0.0
    %965 = vmatprep.subr.mxu0 0.0
    %966 = vmatpush1.msra.mxu0 0.0
    %967 = vmatprep.subr.mxu0 0.0
    %968 = vmatpush1.msra.mxu0 0.0
    %969 = vmatprep.subr.mxu0 0.0
    %970 = vmatpush1.msra.mxu0 0.0
    %971 = vmatprep.subr.mxu0 0.0
    %972 = vmatpush1.msra.mxu0 0.0
    %973 = vmatprep.subr.mxu0 0.0
    %974 = vmatpush1.msra.mxu0 0.0
    %975 = vmatprep.subr.mxu0 0.0
    %976 = vmatpush1.msra.mxu0 0.0
    %977 = vmatprep.mubr.f32.mxu0 0.0
    %978 = vmatmul.mubr.f32.gmra.mrb[0].mxu0 %v447
    %v979 = vpop.f32.mrb[0].mxu0
    %v980 = vadd.f32 %v910, %v979
    %v981 = vpop.f32.mrb[0].mxu0
    %982 = vdwg.mxu0
    %983 = vmatprep.subr.mxu0 0.0
    %984 = vmatpush1.msra.mxu0 %v594
    %985 = vmatprep.subr.mxu0 0.0
    %986 = vmatpush1.msra.mxu0 %v595
    %987 = vmatprep.subr.mxu0 0.0
    %988 = vmatpush1.msra.mxu0 %v596
    %989 = vmatprep.subr.mxu0 0.0
    %990 = vmatpush1.msra.mxu0 %v597
    %991 = vmatprep.subr.mxu0 0.0
    %992 = vmatpush1.msra.mxu0 %v598
    %993 = vmatprep.subr.mxu0 0.0
    %994 = vmatpush1.msra.mxu0 %v599
    %995 = vmatprep.subr.mxu0 0.0
    %996 = vmatpush1.msra.mxu0 0.0
    %997 = vmatprep.subr.mxu0 0.0
    %998 = vmatpush1.msra.mxu0 0.0
    %999 = vmatprep.subr.mxu0 0.0
    %1000 = vmatpush1.msra.mxu0 0.0
    %1001 = vmatprep.subr.mxu0 0.0
    %1002 = vmatpush1.msra.mxu0 0.0
    %1003 = vmatprep.subr.mxu0 0.0
    %1004 = vmatpush1.msra.mxu0 0.0
    %1005 = vmatprep.subr.mxu0 0.0
    %1006 = vmatpush1.msra.mxu0 0.0
    %1007 = vmatprep.subr.mxu0 0.0
    %1008 = vmatpush1.msra.mxu0 0.0
    %1009 = vmatprep.subr.mxu0 0.0
    %1010 = vmatpush1.msra.mxu0 0.0
    %1011 = vmatprep.subr.mxu0 0.0
    %1012 = vmatpush1.msra.mxu0 0.0
    %1013 = vmatprep.subr.mxu0 0.0
    %1014 = vmatpush1.msra.mxu0 0.0
    %1015 = vmatprep.subr.mxu0 0.0
    %1016 = vmatpush1.msra.mxu0 0.0
    %1017 = vmatprep.subr.mxu0 0.0
    %1018 = vmatpush1.msra.mxu0 0.0
    %1019 = vmatprep.subr.mxu0 0.0
    %1020 = vmatpush1.msra.mxu0 0.0
    %1021 = vmatprep.subr.mxu0 0.0
    %1022 = vmatpush1.msra.mxu0 0.0
    %1023 = vmatprep.subr.mxu0 0.0
    %1024 = vmatpush1.msra.mxu0 0.0
    %1025 = vmatprep.subr.mxu0 0.0
    %1026 = vmatpush1.msra.mxu0 0.0
    %1027 = vmatprep.subr.mxu0 0.0
    %1028 = vmatpush1.msra.mxu0 0.0
    %1029 = vmatprep.subr.mxu0 0.0
    %1030 = vmatpush1.msra.mxu0 0.0
    %1031 = vmatprep.subr.mxu0 0.0
    %1032 = vmatpush1.msra.mxu0 0.0
    %1033 = vmatprep.subr.mxu0 0.0
    %1034 = vmatpush1.msra.mxu0 0.0
    %1035 = vmatprep.subr.mxu0 0.0
    %1036 = vmatpush1.msra.mxu0 0.0
    %1037 = vmatprep.subr.mxu0 0.0
    %1038 = vmatpush1.msra.mxu0 0.0
    %1039 = vmatprep.subr.mxu0 0.0
    %1040 = vmatpush1.msra.mxu0 0.0
    %1041 = vmatprep.subr.mxu0 0.0
    %1042 = vmatpush1.msra.mxu0 0.0
    %1043 = vmatprep.subr.mxu0 0.0
    %1044 = vmatpush1.msra.mxu0 0.0
    %1045 = vmatprep.subr.mxu0 0.0
    %1046 = vmatpush1.msra.mxu0 0.0
    %1047 = vmatprep.mubr.f32.mxu0 0.0
    %1048 = vmatmul.mubr.f32.gmra.mrb[0].mxu0 %v683
    %v1049 = vpop.f32.mrb[0].mxu0
    %v1050 = vadd.f32 0.0, %v1049
    %v1051 = vpop.f32.mrb[0].mxu0
    %1052 = vdwg.mxu0
    %v1053 = vadd.f32 %v980, %v1050
    %1054 = vmatprep.subr.mxu0 0.0
    %1055 = vmatpush1.msra.mxu0 %v676
    %1056 = vmatprep.subr.mxu0 0.0
    %1057 = vmatpush1.msra.mxu0 %v677
    %1058 = vmatprep.subr.mxu0 0.0
    %1059 = vmatpush1.msra.mxu0 %v678
    %1060 = vmatprep.subr.mxu0 0.0
    %1061 = vmatpush1.msra.mxu0 %v679
    %1062 = vmatprep.subr.mxu0 0.0
    %1063 = vmatpush1.msra.mxu0 %v680
    %1064 = vmatprep.subr.mxu0 0.0
    %1065 = vmatpush1.msra.mxu0 %v681
    %1066 = vmatprep.subr.mxu0 0.0
    %1067 = vmatpush1.msra.mxu0 0.0
    %1068 = vmatprep.subr.mxu0 0.0
    %1069 = vmatpush1.msra.mxu0 0.0
    %1070 = vmatprep.subr.mxu0 0.0
    %1071 = vmatpush1.msra.mxu0 0.0
    %1072 = vmatprep.subr.mxu0 0.0
    %1073 = vmatpush1.msra.mxu0 0.0
    %1074 = vmatprep.subr.mxu0 0.0
    %1075 = vmatpush1.msra.mxu0 0.0
    %1076 = vmatprep.subr.mxu0 0.0
    %1077 = vmatpush1.msra.mxu0 0.0
    %1078 = vmatprep.subr.mxu0 0.0
    %1079 = vmatpush1.msra.mxu0 0.0
    %1080 = vmatprep.subr.mxu0 0.0
    %1081 = vmatpush1.msra.mxu0 0.0
    %1082 = vmatprep.subr.mxu0 0.0
    %1083 = vmatpush1.msra.mxu0 0.0
    %1084 = vmatprep.subr.mxu0 0.0
    %1085 = vmatpush1.msra.mxu0 0.0
    %1086 = vmatprep.subr.mxu0 0.0
    %1087 = vmatpush1.msra.mxu0 0.0
    %1088 = vmatprep.subr.mxu0 0.0
    %1089 = vmatpush1.msra.mxu0 0.0
    %1090 = vmatprep.subr.mxu0 0.0
    %1091 = vmatpush1.msra.mxu0 0.0
    %1092 = vmatprep.subr.mxu0 0.0
    %1093 = vmatpush1.msra.mxu0 0.0
    %1094 = vmatprep.subr.mxu0 0.0
    %1095 = vmatpush1.msra.mxu0 0.0
    %1096 = vmatprep.subr.mxu0 0.0
    %1097 = vmatpush1.msra.mxu0 0.0
    %1098 = vmatprep.subr.mxu0 0.0
    %1099 = vmatpush1.msra.mxu0 0.0
    %1100 = vmatprep.subr.mxu0 0.0
    %1101 = vmatpush1.msra.mxu0 0.0
    %1102 = vmatprep.subr.mxu0 0.0
    %1103 = vmatpush1.msra.mxu0 0.0
    %1104 = vmatprep.subr.mxu0 0.0
    %1105 = vmatpush1.msra.mxu0 0.0
    %1106 = vmatprep.subr.mxu0 0.0
    %1107 = vmatpush1.msra.mxu0 0.0
    %1108 = vmatprep.subr.mxu0 0.0
    %1109 = vmatpush1.msra.mxu0 0.0
    %1110 = vmatprep.subr.mxu0 0.0
    %1111 = vmatpush1.msra.mxu0 0.0
    %1112 = vmatprep.subr.mxu0 0.0
    %1113 = vmatpush1.msra.mxu0 0.0
    %1114 = vmatprep.subr.mxu0 0.0
    %1115 = vmatpush1.msra.mxu0 0.0
    %1116 = vmatprep.subr.mxu0 0.0
    %1117 = vmatpush1.msra.mxu0 0.0
    %1118 = vmatprep.mubr.f32.mxu0 0.0
    %1119 = vmatmul.mubr.f32.gmra.mrb[0].mxu0 %v765
    %v1120 = vpop.f32.mrb[0].mxu0
    %v1121 = vadd.f32 0.0, %v1120
    %v1122 = vpop.f32.mrb[0].mxu0
    %1123 = vdwg.mxu0
    %v1124 = vadd.f32 %v1053, %v1121
    %v1125 = vld [vmem:[#allocation2 + $0x10] sm:$0xff]
    %v1127 = vsel %vm224, %v1125, 0
    %1129 = vmatprep.subr.mxu0 0.0
    %1130 = vmatpush1.msra.mxu0 %v758
    %1131 = vmatprep.subr.mxu0 0.0
    %1132 = vmatpush1.msra.mxu0 %v759
    %1133 = vmatprep.subr.mxu0 0.0
    %1134 = vmatpush1.msra.mxu0 %v760
    %1135 = vmatprep.subr.mxu0 0.0
    %1136 = vmatpush1.msra.mxu0 %v761
    %1137 = vmatprep.subr.mxu0 0.0
    %1138 = vmatpush1.msra.mxu0 %v762
    %1139 = vmatprep.subr.mxu0 0.0
    %1140 = vmatpush1.msra.mxu0 %v763
    %1141 = vmatprep.subr.mxu0 0.0
    %1142 = vmatpush1.msra.mxu0 0.0
    %1143 = vmatprep.subr.mxu0 0.0
    %1144 = vmatpush1.msra.mxu0 0.0
    %1145 = vmatprep.subr.mxu0 0.0
    %1146 = vmatpush1.msra.mxu0 0.0
    %1147 = vmatprep.subr.mxu0 0.0
    %1148 = vmatpush1.msra.mxu0 0.0
    %1149 = vmatprep.subr.mxu0 0.0
    %1150 = vmatpush1.msra.mxu0 0.0
    %1151 = vmatprep.subr.mxu0 0.0
    %1152 = vmatpush1.msra.mxu0 0.0
    %1153 = vmatprep.subr.mxu0 0.0
    %1154 = vmatpush1.msra.mxu0 0.0
    %1155 = vmatprep.subr.mxu0 0.0
    %1156 = vmatpush1.msra.mxu0 0.0
    %1157 = vmatprep.subr.mxu0 0.0
    %1158 = vmatpush1.msra.mxu0 0.0
    %1159 = vmatprep.subr.mxu0 0.0
    %1160 = vmatpush1.msra.mxu0 0.0
    %1161 = vmatprep.subr.mxu0 0.0
    %1162 = vmatpush1.msra.mxu0 0.0
    %1163 = vmatprep.subr.mxu0 0.0
    %1164 = vmatpush1.msra.mxu0 0.0
    %1165 = vmatprep.subr.mxu0 0.0
    %1166 = vmatpush1.msra.mxu0 0.0
    %1167 = vmatprep.subr.mxu0 0.0
    %1168 = vmatpush1.msra.mxu0 0.0
    %1169 = vmatprep.subr.mxu0 0.0
    %1170 = vmatpush1.msra.mxu0 0.0
    %1171 = vmatprep.subr.mxu0 0.0
    %1172 = vmatpush1.msra.mxu0 0.0
    %1173 = vmatprep.subr.mxu0 0.0
    %1174 = vmatpush1.msra.mxu0 0.0
    %1175 = vmatprep.subr.mxu0 0.0
    %1176 = vmatpush1.msra.mxu0 0.0
    %1177 = vmatprep.subr.mxu0 0.0
    %1178 = vmatpush1.msra.mxu0 0.0
    %1179 = vmatprep.subr.mxu0 0.0
    %1180 = vmatpush1.msra.mxu0 0.0
    %1181 = vmatprep.subr.mxu0 0.0
    %1182 = vmatpush1.msra.mxu0 0.0
    %1183 = vmatprep.subr.mxu0 0.0
    %1184 = vmatpush1.msra.mxu0 0.0
    %1185 = vmatprep.subr.mxu0 0.0
    %1186 = vmatpush1.msra.mxu0 0.0
    %1187 = vmatprep.subr.mxu0 0.0
    %1188 = vmatpush1.msra.mxu0 0.0
    %1189 = vmatprep.subr.mxu0 0.0
    %1190 = vmatpush1.msra.mxu0 0.0
    %1191 = vmatprep.subr.mxu0 0.0
    %1192 = vmatpush1.msra.mxu0 0.0
    %1193 = vmatprep.mubr.f32.mxu0 0.0
    %1194 = vmatmul.mubr.f32.gmra.mrb[0].mxu0 %v1127
    %v1195 = vpop.f32.mrb[0].mxu0
    %v1196 = vadd.f32 0.0, %v1195
    %v1197 = vpop.f32.mrb[0].mxu0
    %1198 = vdwg.mxu0
    %v1199 = vadd.f32 %v1124, %v1196
    %1201 = vrot.lane.b32.xlu0 %v1199, 96
    %v1202 = vpop.permute.xlu0 %1201
    %v1204 = vmax.f32 %v1199, %v1202
    %v1205 = vmax.f32 %v842, %v1204
    %v1206 = vld [vmem:[%s7 + $0x3] sm:$0x1]
    %v1207 = vld [vmem:[%s7 + $0x4] sm:$0x1]
    %v1208 = vld [vmem:[%s7 + $0x5] sm:$0x1]
    %v1209 = vlaneseq
    %v1210 = vshrl.u32 %v1209, 7
    %v1211 = vsub.s32 0, %v1210
    %v1212 = vrot.slane %v1206, %v1211
    %v1213 = vadd.f32 %v1205, %v1212
    %v1214 = vmax.f32 %v1213, 0.0
    %vm1215 = vcmask 261120
    %v1216 = vsel %vm1215, %v1214, 0.0
    %v1217 = vrot.slane %v1216, 4
    %v1218 = vadd.f32 %v1216, %v1217
    %v1219 = vrot.slane %v1218, 2
    %v1220 = vadd.f32 %v1218, %v1219
    %v1221 = vrot.slane %v1220, 1
    %v1222 = vadd.f32 %v1220, %v1221
    %v1223 = vmul.f32 %v1214, %v1214
    %v1224 = vsel %vm1215, %v1223, 0.0
    %v1225 = vrot.slane %v1224, 4
    %v1226 = vadd.f32 %v1224, %v1225
    %v1227 = vrot.slane %v1226, 2
    %v1228 = vadd.f32 %v1226, %v1227
    %v1229 = vrot.slane %v1228, 1
    %v1230 = vadd.f32 %v1228, %v1229
    %v1231 = vld [vmem:[%s6] sm:$0xff]
    %v1232 = vld [vmem:[%s6 + $0x8] sm:$0xff]
    %v1233 = vld [vmem:[%s6 + $0x10] sm:$0xff]
    %v1234 = vld [vmem:[%s6 + $0x18] sm:$0xff]
    %v1236 = vsel %vm1215, %v1222, 0
    %1238 = vmatprep.subr.mxu0 0.0
    %1239 = vmatpush1.msra.mxu0 %v1231
    %1240 = vmatprep.subr.mxu0 0.0
    %1241 = vmatpush1.msra.mxu0 %v1232
    %1242 = vmatprep.subr.mxu0 0.0
    %1243 = vmatpush1.msra.mxu0 %v1233
    %1244 = vmatprep.subr.mxu0 0.0
    %1245 = vmatpush1.msra.mxu0 %v1234
    %1246 = vmatprep.subr.mxu0 0.0
    %1247 = vmatpush1.msra.mxu0 0.0
    %1248 = vmatprep.subr.mxu0 0.0
    %1249 = vmatpush1.msra.mxu0 0.0
    %1250 = vmatprep.subr.mxu0 0.0
    %1251 = vmatpush1.msra.mxu0 0.0
    %1252 = vmatprep.subr.mxu0 0.0
    %1253 = vmatpush1.msra.mxu0 0.0
    %1254 = vmatprep.subr.mxu0 0.0
    %1255 = vmatpush1.msra.mxu0 0.0
    %1256 = vmatprep.subr.mxu0 0.0
    %1257 = vmatpush1.msra.mxu0 0.0
    %1258 = vmatprep.subr.mxu0 0.0
    %1259 = vmatpush1.msra.mxu0 0.0
    %1260 = vmatprep.subr.mxu0 0.0
    %1261 = vmatpush1.msra.mxu0 0.0
    %1262 = vmatprep.subr.mxu0 0.0
    %1263 = vmatpush1.msra.mxu0 0.0
    %1264 = vmatprep.subr.mxu0 0.0
    %1265 = vmatpush1.msra.mxu0 0.0
    %1266 = vmatprep.subr.mxu0 0.0
    %1267 = vmatpush1.msra.mxu0 0.0
    %1268 = vmatprep.subr.mxu0 0.0
    %1269 = vmatpush1.msra.mxu0 0.0
    %1270 = vmatprep.subr.mxu0 0.0
    %1271 = vmatpush1.msra.mxu0 0.0
    %1272 = vmatprep.subr.mxu0 0.0
    %1273 = vmatpush1.msra.mxu0 0.0
    %1274 = vmatprep.subr.mxu0 0.0
    %1275 = vmatpush1.msra.mxu0 0.0
    %1276 = vmatprep.subr.mxu0 0.0
    %1277 = vmatpush1.msra.mxu0 0.0
    %1278 = vmatprep.subr.mxu0 0.0
    %1279 = vmatpush1.msra.mxu0 0.0
    %1280 = vmatprep.subr.mxu0 0.0
    %1281 = vmatpush1.msra.mxu0 0.0
    %1282 = vmatprep.subr.mxu0 0.0
    %1283 = vmatpush1.msra.mxu0 0.0
    %1284 = vmatprep.subr.mxu0 0.0
    %1285 = vmatpush1.msra.mxu0 0.0
    %1286 = vmatprep.subr.mxu0 0.0
    %1287 = vmatpush1.msra.mxu0 0.0
    %1288 = vmatprep.subr.mxu0 0.0
    %1289 = vmatpush1.msra.mxu0 0.0
    %1290 = vmatprep.subr.mxu0 0.0
    %1291 = vmatpush1.msra.mxu0 0.0
    %1292 = vmatprep.subr.mxu0 0.0
    %1293 = vmatpush1.msra.mxu0 0.0
    %1294 = vmatprep.subr.mxu0 0.0
    %1295 = vmatpush1.msra.mxu0 0.0
    %1296 = vmatprep.subr.mxu0 0.0
    %1297 = vmatpush1.msra.mxu0 0.0
    %1298 = vmatprep.subr.mxu0 0.0
    %1299 = vmatpush1.msra.mxu0 0.0
    %1300 = vmatprep.subr.mxu0 0.0
    %1301 = vmatpush1.msra.mxu0 0.0
    %1302 = vmatprep.mubr.f32.mxu0 0.0
    %1303 = vmatmul.mubr.f32.gmra.mrb[0].mxu0 %v1236
    %v1304 = vpop.f32.mrb[0].mxu0
    %v1305 = vadd.f32 0.0, %v1304
    %v1306 = vpop.f32.mrb[0].mxu0
    %1307 = vdwg.mxu0
    %v1309 = vsel %vm1215, %v1230, 0
    %1311 = vmatprep.subr.mxu0 0.0
    %1312 = vmatpush1.msra.mxu0 %v1231
    %1313 = vmatprep.subr.mxu0 0.0
    %1314 = vmatpush1.msra.mxu0 %v1232
    %1315 = vmatprep.subr.mxu0 0.0
    %1316 = vmatpush1.msra.mxu0 %v1233
    %1317 = vmatprep.subr.mxu0 0.0
    %1318 = vmatpush1.msra.mxu0 %v1234
    %1319 = vmatprep.subr.mxu0 0.0
    %1320 = vmatpush1.msra.mxu0 0.0
    %1321 = vmatprep.subr.mxu0 0.0
    %1322 = vmatpush1.msra.mxu0 0.0
    %1323 = vmatprep.subr.mxu0 0.0
    %1324 = vmatpush1.msra.mxu0 0.0
    %1325 = vmatprep.subr.mxu0 0.0
    %1326 = vmatpush1.msra.mxu0 0.0
    %1327 = vmatprep.subr.mxu0 0.0
    %1328 = vmatpush1.msra.mxu0 0.0
    %1329 = vmatprep.subr.mxu0 0.0
    %1330 = vmatpush1.msra.mxu0 0.0
    %1331 = vmatprep.subr.mxu0 0.0
    %1332 = vmatpush1.msra.mxu0 0.0
    %1333 = vmatprep.subr.mxu0 0.0
    %1334 = vmatpush1.msra.mxu0 0.0
    %1335 = vmatprep.subr.mxu0 0.0
    %1336 = vmatpush1.msra.mxu0 0.0
    %1337 = vmatprep.subr.mxu0 0.0
    %1338 = vmatpush1.msra.mxu0 0.0
    %1339 = vmatprep.subr.mxu0 0.0
    %1340 = vmatpush1.msra.mxu0 0.0
    %1341 = vmatprep.subr.mxu0 0.0
    %1342 = vmatpush1.msra.mxu0 0.0
    %1343 = vmatprep.subr.mxu0 0.0
    %1344 = vmatpush1.msra.mxu0 0.0
    %1345 = vmatprep.subr.mxu0 0.0
    %1346 = vmatpush1.msra.mxu0 0.0
    %1347 = vmatprep.subr.mxu0 0.0
    %1348 = vmatpush1.msra.mxu0 0.0
    %1349 = vmatprep.subr.mxu0 0.0
    %1350 = vmatpush1.msra.mxu0 0.0
    %1351 = vmatprep.subr.mxu0 0.0
    %1352 = vmatpush1.msra.mxu0 0.0
    %1353 = vmatprep.subr.mxu0 0.0
    %1354 = vmatpush1.msra.mxu0 0.0
    %1355 = vmatprep.subr.mxu0 0.0
    %1356 = vmatpush1.msra.mxu0 0.0
    %1357 = vmatprep.subr.mxu0 0.0
    %1358 = vmatpush1.msra.mxu0 0.0
    %1359 = vmatprep.subr.mxu0 0.0
    %1360 = vmatpush1.msra.mxu0 0.0
    %1361 = vmatprep.subr.mxu0 0.0
    %1362 = vmatpush1.msra.mxu0 0.0
    %1363 = vmatprep.subr.mxu0 0.0
    %1364 = vmatpush1.msra.mxu0 0.0
    %1365 = vmatprep.subr.mxu0 0.0
    %1366 = vmatpush1.msra.mxu0 0.0
    %1367 = vmatprep.subr.mxu0 0.0
    %1368 = vmatpush1.msra.mxu0 0.0
    %1369 = vmatprep.subr.mxu0 0.0
    %1370 = vmatpush1.msra.mxu0 0.0
    %1371 = vmatprep.subr.mxu0 0.0
    %1372 = vmatpush1.msra.mxu0 0.0
    %1373 = vmatprep.subr.mxu0 0.0
    %1374 = vmatpush1.msra.mxu0 0.0
    %1375 = vmatprep.mubr.f32.mxu0 0.0
    %1376 = vmatmul.mubr.f32.gmra.mrb[0].mxu0 %v1309
    %v1377 = vpop.f32.mrb[0].mxu0
    %v1378 = vadd.f32 0.0, %v1377
    %v1379 = vpop.f32.mrb[0].mxu0
    %1380 = vdwg.mxu0
    %v1381 = vmul.f32 %v1305, %v1305
    %v1382 = vsub.f32 %v1378, %v1381
    %v1383 = vadd.f32 %v1382, 1e-05
    %v1384 = vrsqrt.pop %v1383
    %v1385 = vmul.f32 %v1207, %v1384
    %v1386 = vlaneseq
    %v1387 = vshrl.u32 %v1386, 7
    %v1388 = vsub.s32 0, %v1387
    %v1389 = vrot.slane %v1305, %v1388
    %v1390 = vsub.f32 %v1214, %v1389
    %v1391 = vlaneseq
    %v1392 = vshrl.u32 %v1391, 7
    %v1393 = vsub.s32 0, %v1392
    %v1394 = vrot.slane %v1385, %v1393
    %v1395 = vmul.f32 %v1390, %v1394
    %v1396 = vlaneseq
    %v1397 = vshrl.u32 %v1396, 7
    %v1398 = vsub.s32 0, %v1397
    %v1399 = vrot.slane %v1208, %v1398
    %v1400 = vadd.f32 %v1395, %v1399
    %v1401 = vld [vmem:[%s7 + $0x6] sm:$0x1]
    %v1402 = vld [vmem:[%s7 + $0x7] sm:$0x1]
    %v1403 = vld [vmem:[%s3] sm:$0xff]
    %v1404 = vld [vmem:[%s3 + $0x8] sm:$0xff]
    %v1405 = vld [vmem:[%s3 + $0x10] sm:$0xff]
    %v1406 = vld [vmem:[%s3 + $0x18] sm:$0xff]
    %s1407 = scalar_lea.vmem %s3, 32
    %v1408 = vld [vmem:[%s1407] sm:$0xff]
    %v1409 = vld [vmem:[%s1407 + $0x8] sm:$0xff]
    %v1410 = vld [vmem:[%s1407 + $0x10] sm:$0xff]
    %v1411 = vld [vmem:[%s1407 + $0x18] sm:$0xff]
    %v1413 = vrot.slane %v1400, 2
    %v1414 = vsel %vm1215, %v1413, 0
    %1416 = vmatprep.subr.mxu0 0.0
    %1417 = vmatpush1.msra.mxu0 %v1408
    %1418 = vmatprep.subr.mxu0 0.0
    %1419 = vmatpush1.msra.mxu0 %v1409
    %1420 = vmatprep.subr.mxu0 0.0
    %1421 = vmatpush1.msra.mxu0 %v1410
    %1422 = vmatprep.subr.mxu0 0.0
    %1423 = vmatpush1.msra.mxu0 %v1411
    %1424 = vmatprep.subr.mxu0 0.0
    %1425 = vmatpush1.msra.mxu0 0.0
    %1426 = vmatprep.subr.mxu0 0.0
    %1427 = vmatpush1.msra.mxu0 0.0
    %1428 = vmatprep.subr.mxu0 0.0
    %1429 = vmatpush1.msra.mxu0 0.0
    %1430 = vmatprep.subr.mxu0 0.0
    %1431 = vmatpush1.msra.mxu0 0.0
    %1432 = vmatprep.subr.mxu0 0.0
    %1433 = vmatpush1.msra.mxu0 0.0
    %1434 = vmatprep.subr.mxu0 0.0
    %1435 = vmatpush1.msra.mxu0 0.0
    %1436 = vmatprep.subr.mxu0 0.0
    %1437 = vmatpush1.msra.mxu0 0.0
    %1438 = vmatprep.subr.mxu0 0.0
    %1439 = vmatpush1.msra.mxu0 0.0
    %1440 = vmatprep.subr.mxu0 0.0
    %1441 = vmatpush1.msra.mxu0 0.0
    %1442 = vmatprep.subr.mxu0 0.0
    %1443 = vmatpush1.msra.mxu0 0.0
    %1444 = vmatprep.subr.mxu0 0.0
    %1445 = vmatpush1.msra.mxu0 0.0
    %1446 = vmatprep.subr.mxu0 0.0
    %1447 = vmatpush1.msra.mxu0 0.0
    %1448 = vmatprep.subr.mxu0 0.0
    %1449 = vmatpush1.msra.mxu0 0.0
    %1450 = vmatprep.subr.mxu0 0.0
    %1451 = vmatpush1.msra.mxu0 0.0
    %1452 = vmatprep.subr.mxu0 0.0
    %1453 = vmatpush1.msra.mxu0 0.0
    %1454 = vmatprep.subr.mxu0 0.0
    %1455 = vmatpush1.msra.mxu0 0.0
    %1456 = vmatprep.subr.mxu0 0.0
    %1457 = vmatpush1.msra.mxu0 0.0
    %1458 = vmatprep.subr.mxu0 0.0
    %1459 = vmatpush1.msra.mxu0 0.0
    %1460 = vmatprep.subr.mxu0 0.0
    %1461 = vmatpush1.msra.mxu0 0.0
    %1462 = vmatprep.subr.mxu0 0.0
    %1463 = vmatpush1.msra.mxu0 0.0
    %1464 = vmatprep.subr.mxu0 0.0
    %1465 = vmatpush1.msra.mxu0 0.0
    %1466 = vmatprep.subr.mxu0 0.0
    %1467 = vmatpush1.msra.mxu0 0.0
    %1468 = vmatprep.subr.mxu0 0.0
    %1469 = vmatpush1.msra.mxu0 0.0
    %1470 = vmatprep.subr.mxu0 0.0
    %1471 = vmatpush1.msra.mxu0 0.0
    %1472 = vmatprep.subr.mxu0 0.0
    %1473 = vmatpush1.msra.mxu0 0.0
    %1474 = vmatprep.subr.mxu0 0.0
    %1475 = vmatpush1.msra.mxu0 0.0
    %1476 = vmatprep.subr.mxu0 0.0
    %1477 = vmatpush1.msra.mxu0 0.0
    %1478 = vmatprep.subr.mxu0 0.0
    %1479 = vmatpush1.msra.mxu0 0.0
    %1480 = vmatprep.mubr.f32.mxu0 0.0
    %1481 = vmatmul.mubr.f32.gmra.mrb[0].mxu0 %v1414
    %v1482 = vpop.f32.mrb[0].mxu0
    %v1483 = vadd.f32 0.0, %v1482
    %v1484 = vpop.f32.mrb[0].mxu0
    %1485 = vdwg.mxu0
    %v1486 = vsel %vm1215, %v1400, 0
    %1488 = vmatprep.subr.mxu0 0.0
    %1489 = vmatpush1.msra.mxu0 %v1403
    %1490 = vmatprep.subr.mxu0 0.0
    %1491 = vmatpush1.msra.mxu0 %v1404
    %1492 = vmatprep.subr.mxu0 0.0
    %1493 = vmatpush1.msra.mxu0 %v1405
    %1494 = vmatprep.subr.mxu0 0.0
    %1495 = vmatpush1.msra.mxu0 %v1406
    %1496 = vmatprep.subr.mxu0 0.0
    %1497 = vmatpush1.msra.mxu0 0.0
    %1498 = vmatprep.subr.mxu0 0.0
    %1499 = vmatpush1.msra.mxu0 0.0
    %1500 = vmatprep.subr.mxu0 0.0
    %1501 = vmatpush1.msra.mxu0 0.0
    %1502 = vmatprep.subr.mxu0 0.0
    %1503 = vmatpush1.msra.mxu0 0.0
    %1504 = vmatprep.subr.mxu0 0.0
    %1505 = vmatpush1.msra.mxu0 0.0
    %1506 = vmatprep.subr.mxu0 0.0
    %1507 = vmatpush1.msra.mxu0 0.0
    %1508 = vmatprep.subr.mxu0 0.0
    %1509 = vmatpush1.msra.mxu0 0.0
    %1510 = vmatprep.subr.mxu0 0.0
    %1511 = vmatpush1.msra.mxu0 0.0
    %1512 = vmatprep.subr.mxu0 0.0
    %1513 = vmatpush1.msra.mxu0 0.0
    %1514 = vmatprep.subr.mxu0 0.0
    %1515 = vmatpush1.msra.mxu0 0.0
    %1516 = vmatprep.subr.mxu0 0.0
    %1517 = vmatpush1.msra.mxu0 0.0
    %1518 = vmatprep.subr.mxu0 0.0
    %1519 = vmatpush1.msra.mxu0 0.0
    %1520 = vmatprep.subr.mxu0 0.0
    %1521 = vmatpush1.msra.mxu0 0.0
    %1522 = vmatprep.subr.mxu0 0.0
    %1523 = vmatpush1.msra.mxu0 0.0
    %1524 = vmatprep.subr.mxu0 0.0
    %1525 = vmatpush1.msra.mxu0 0.0
    %1526 = vmatprep.subr.mxu0 0.0
    %1527 = vmatpush1.msra.mxu0 0.0
    %1528 = vmatprep.subr.mxu0 0.0
    %1529 = vmatpush1.msra.mxu0 0.0
    %1530 = vmatprep.subr.mxu0 0.0
    %1531 = vmatpush1.msra.mxu0 0.0
    %1532 = vmatprep.subr.mxu0 0.0
    %1533 = vmatpush1.msra.mxu0 0.0
    %1534 = vmatprep.subr.mxu0 0.0
    %1535 = vmatpush1.msra.mxu0 0.0
    %1536 = vmatprep.subr.mxu0 0.0
    %1537 = vmatpush1.msra.mxu0 0.0
    %1538 = vmatprep.subr.mxu0 0.0
    %1539 = vmatpush1.msra.mxu0 0.0
    %1540 = vmatprep.subr.mxu0 0.0
    %1541 = vmatpush1.msra.mxu0 0.0
    %1542 = vmatprep.subr.mxu0 0.0
    %1543 = vmatpush1.msra.mxu0 0.0
    %1544 = vmatprep.subr.mxu0 0.0
    %1545 = vmatpush1.msra.mxu0 0.0
    %1546 = vmatprep.subr.mxu0 0.0
    %1547 = vmatpush1.msra.mxu0 0.0
    %1548 = vmatprep.subr.mxu0 0.0
    %1549 = vmatpush1.msra.mxu0 0.0
    %1550 = vmatprep.subr.mxu0 0.0
    %1551 = vmatpush1.msra.mxu0 0.0
    %1552 = vmatprep.mubr.f32.mxu0 0.0
    %1553 = vmatmul.mubr.f32.gmra.mrb[0].mxu0 %v1486
    %v1554 = vpop.f32.mrb[0].mxu0
    %v1555 = vadd.f32 %v1483, %v1554
    %v1556 = vpop.f32.mrb[0].mxu0
    %1557 = vdwg.mxu0
    %s1558 = scalar_lea.vmem %s3, 64
    %v1559 = vld [vmem:[%s1558] sm:$0xff]
    %v1560 = vld [vmem:[%s1558 + $0x8] sm:$0xff]
    %v1561 = vld [vmem:[%s1558 + $0x10] sm:$0xff]
    %v1562 = vld [vmem:[%s1558 + $0x18] sm:$0xff]
    %v1563 = vrot.slane %v1400, 4
    %v1564 = vsel %vm1215, %v1563, 0
    %1566 = vmatprep.subr.mxu0 0.0
    %1567 = vmatpush1.msra.mxu0 %v1559
    %1568 = vmatprep.subr.mxu0 0.0
    %1569 = vmatpush1.msra.mxu0 %v1560
    %1570 = vmatprep.subr.mxu0 0.0
    %1571 = vmatpush1.msra.mxu0 %v1561
    %1572 = vmatprep.subr.mxu0 0.0
    %1573 = vmatpush1.msra.mxu0 %v1562
    %1574 = vmatprep.subr.mxu0 0.0
    %1575 = vmatpush1.msra.mxu0 0.0
    %1576 = vmatprep.subr.mxu0 0.0
    %1577 = vmatpush1.msra.mxu0 0.0
    %1578 = vmatprep.subr.mxu0 0.0
    %1579 = vmatpush1.msra.mxu0 0.0
    %1580 = vmatprep.subr.mxu0 0.0
    %1581 = vmatpush1.msra.mxu0 0.0
    %1582 = vmatprep.subr.mxu0 0.0
    %1583 = vmatpush1.msra.mxu0 0.0
    %1584 = vmatprep.subr.mxu0 0.0
    %1585 = vmatpush1.msra.mxu0 0.0
    %1586 = vmatprep.subr.mxu0 0.0
    %1587 = vmatpush1.msra.mxu0 0.0
    %1588 = vmatprep.subr.mxu0 0.0
    %1589 = vmatpush1.msra.mxu0 0.0
    %1590 = vmatprep.subr.mxu0 0.0
    %1591 = vmatpush1.msra.mxu0 0.0
    %1592 = vmatprep.subr.mxu0 0.0
    %1593 = vmatpush1.msra.mxu0 0.0
    %1594 = vmatprep.subr.mxu0 0.0
    %1595 = vmatpush1.msra.mxu0 0.0
    %1596 = vmatprep.subr.mxu0 0.0
    %1597 = vmatpush1.msra.mxu0 0.0
    %1598 = vmatprep.subr.mxu0 0.0
    %1599 = vmatpush1.msra.mxu0 0.0
    %1600 = vmatprep.subr.mxu0 0.0
    %1601 = vmatpush1.msra.mxu0 0.0
    %1602 = vmatprep.subr.mxu0 0.0
    %1603 = vmatpush1.msra.mxu0 0.0
    %1604 = vmatprep.subr.mxu0 0.0
    %1605 = vmatpush1.msra.mxu0 0.0
    %1606 = vmatprep.subr.mxu0 0.0
    %1607 = vmatpush1.msra.mxu0 0.0
    %1608 = vmatprep.subr.mxu0 0.0
    %1609 = vmatpush1.msra.mxu0 0.0
    %1610 = vmatprep.subr.mxu0 0.0
    %1611 = vmatpush1.msra.mxu0 0.0
    %1612 = vmatprep.subr.mxu0 0.0
    %1613 = vmatpush1.msra.mxu0 0.0
    %1614 = vmatprep.subr.mxu0 0.0
    %1615 = vmatpush1.msra.mxu0 0.0
    %1616 = vmatprep.subr.mxu0 0.0
    %1617 = vmatpush1.msra.mxu0 0.0
    %1618 = vmatprep.subr.mxu0 0.0
    %1619 = vmatpush1.msra.mxu0 0.0
    %1620 = vmatprep.subr.mxu0 0.0
    %1621 = vmatpush1.msra.mxu0 0.0
    %1622 = vmatprep.subr.mxu0 0.0
    %1623 = vmatpush1.msra.mxu0 0.0
    %1624 = vmatprep.subr.mxu0 0.0
    %1625 = vmatpush1.msra.mxu0 0.0
    %1626 = vmatprep.subr.mxu0 0.0
    %1627 = vmatpush1.msra.mxu0 0.0
    %1628 = vmatprep.subr.mxu0 0.0
    %1629 = vmatpush1.msra.mxu0 0.0
    %1630 = vmatprep.mubr.f32.mxu0 0.0
    %1631 = vmatmul.mubr.f32.gmra.mrb[0].mxu0 %v1564
    %v1632 = vpop.f32.mrb[0].mxu0
    %v1633 = vadd.f32 0.0, %v1632
    %v1634 = vpop.f32.mrb[0].mxu0
    %1635 = vdwg.mxu0
    %v1636 = vadd.f32 %v1555, %v1633
    %s1637 = scalar_lea.vmem %s3, 96
    %v1638 = vld [vmem:[%s1637] sm:$0xff]
    %v1639 = vld [vmem:[%s1637 + $0x8] sm:$0xff]
    %v1640 = vld [vmem:[%s1637 + $0x10] sm:$0xff]
    %v1641 = vld [vmem:[%s1637 + $0x18] sm:$0xff]
    %v1642 = vrot.slane %v1400, 6
    %v1643 = vsel %vm1215, %v1642, 0
    %1645 = vmatprep.subr.mxu0 0.0
    %1646 = vmatpush1.msra.mxu0 %v1638
    %1647 = vmatprep.subr.mxu0 0.0
    %1648 = vmatpush1.msra.mxu0 %v1639
    %1649 = vmatprep.subr.mxu0 0.0
    %1650 = vmatpush1.msra.mxu0 %v1640
    %1651 = vmatprep.subr.mxu0 0.0
    %1652 = vmatpush1.msra.mxu0 %v1641
    %1653 = vmatprep.subr.mxu0 0.0
    %1654 = vmatpush1.msra.mxu0 0.0
    %1655 = vmatprep.subr.mxu0 0.0
    %1656 = vmatpush1.msra.mxu0 0.0
    %1657 = vmatprep.subr.mxu0 0.0
    %1658 = vmatpush1.msra.mxu0 0.0
    %1659 = vmatprep.subr.mxu0 0.0
    %1660 = vmatpush1.msra.mxu0 0.0
    %1661 = vmatprep.subr.mxu0 0.0
    %1662 = vmatpush1.msra.mxu0 0.0
    %1663 = vmatprep.subr.mxu0 0.0
    %1664 = vmatpush1.msra.mxu0 0.0
    %1665 = vmatprep.subr.mxu0 0.0
    %1666 = vmatpush1.msra.mxu0 0.0
    %1667 = vmatprep.subr.mxu0 0.0
    %1668 = vmatpush1.msra.mxu0 0.0
    %1669 = vmatprep.subr.mxu0 0.0
    %1670 = vmatpush1.msra.mxu0 0.0
    %1671 = vmatprep.subr.mxu0 0.0
    %1672 = vmatpush1.msra.mxu0 0.0
    %1673 = vmatprep.subr.mxu0 0.0
    %1674 = vmatpush1.msra.mxu0 0.0
    %1675 = vmatprep.subr.mxu0 0.0
    %1676 = vmatpush1.msra.mxu0 0.0
    %1677 = vmatprep.subr.mxu0 0.0
    %1678 = vmatpush1.msra.mxu0 0.0
    %1679 = vmatprep.subr.mxu0 0.0
    %1680 = vmatpush1.msra.mxu0 0.0
    %1681 = vmatprep.subr.mxu0 0.0
    %1682 = vmatpush1.msra.mxu0 0.0
    %1683 = vmatprep.subr.mxu0 0.0
    %1684 = vmatpush1.msra.mxu0 0.0
    %1685 = vmatprep.subr.mxu0 0.0
    %1686 = vmatpush1.msra.mxu0 0.0
    %1687 = vmatprep.subr.mxu0 0.0
    %1688 = vmatpush1.msra.mxu0 0.0
    %1689 = vmatprep.subr.mxu0 0.0
    %1690 = vmatpush1.msra.mxu0 0.0
    %1691 = vmatprep.subr.mxu0 0.0
    %1692 = vmatpush1.msra.mxu0 0.0
    %1693 = vmatprep.subr.mxu0 0.0
    %1694 = vmatpush1.msra.mxu0 0.0
    %1695 = vmatprep.subr.mxu0 0.0
    %1696 = vmatpush1.msra.mxu0 0.0
    %1697 = vmatprep.subr.mxu0 0.0
    %1698 = vmatpush1.msra.mxu0 0.0
    %1699 = vmatprep.subr.mxu0 0.0
    %1700 = vmatpush1.msra.mxu0 0.0
    %1701 = vmatprep.subr.mxu0 0.0
    %1702 = vmatpush1.msra.mxu0 0.0
    %1703 = vmatprep.subr.mxu0 0.0
    %1704 = vmatpush1.msra.mxu0 0.0
    %1705 = vmatprep.subr.mxu0 0.0
    %1706 = vmatpush1.msra.mxu0 0.0
    %1707 = vmatprep.subr.mxu0 0.0
    %1708 = vmatpush1.msra.mxu0 0.0
    %1709 = vmatprep.mubr.f32.mxu0 0.0
    %1710 = vmatmul.mubr.f32.gmra.mrb[0].mxu0 %v1643
    %v1711 = vpop.f32.mrb[0].mxu0
    %v1712 = vadd.f32 0.0, %v1711
    %v1713 = vpop.f32.mrb[0].mxu0
    %1714 = vdwg.mxu0
    %v1715 = vadd.f32 %v1636, %v1712
    %v1716 = vlaneseq
    %v1717 = vshrl.u32 %v1716, 7
    %v1718 = vsub.s32 0, %v1717
    %v1719 = vrot.slane %v1401, %v1718
    %v1720 = vadd.f32 %v1715, %v1719
    %v1721 = vld [vmem:[%s4] sm:$0xff]
    %v1722 = vld [vmem:[%s4 + $0x8] sm:$0xff]
    %v1723 = vld [vmem:[%s4 + $0x10] sm:$0xff]
    %v1724 = vld [vmem:[%s4 + $0x18] sm:$0xff]
    %v1725 = vlaneseq
    %v1726 = vshrl.u32 %v1725, 7
    %v1727 = vsub.s32 0, %v1726
    %v1728 = vrot.slane %v1402, %v1727
    %v1730 = vsel %vm1215, %v1720, 0
    %1732 = vmatprep.subr.mxu0 0.0
    %1733 = vmatpush1.msra.mxu0 %v1721
    %1734 = vmatprep.subr.mxu0 0.0
    %1735 = vmatpush1.msra.mxu0 %v1722
    %1736 = vmatprep.subr.mxu0 0.0
    %1737 = vmatpush1.msra.mxu0 %v1723
    %1738 = vmatprep.subr.mxu0 0.0
    %1739 = vmatpush1.msra.mxu0 %v1724
    %1740 = vmatprep.subr.mxu0 0.0
    %1741 = vmatpush1.msra.mxu0 0.0
    %1742 = vmatprep.subr.mxu0 0.0
    %1743 = vmatpush1.msra.mxu0 0.0
    %1744 = vmatprep.subr.mxu0 0.0
    %1745 = vmatpush1.msra.mxu0 0.0
    %1746 = vmatprep.subr.mxu0 0.0
    %1747 = vmatpush1.msra.mxu0 0.0
    %1748 = vmatprep.subr.mxu0 0.0
    %1749 = vmatpush1.msra.mxu0 0.0
    %1750 = vmatprep.subr.mxu0 0.0
    %1751 = vmatpush1.msra.mxu0 0.0
    %1752 = vmatprep.subr.mxu0 0.0
    %1753 = vmatpush1.msra.mxu0 0.0
    %1754 = vmatprep.subr.mxu0 0.0
    %1755 = vmatpush1.msra.mxu0 0.0
    %1756 = vmatprep.subr.mxu0 0.0
    %1757 = vmatpush1.msra.mxu0 0.0
    %1758 = vmatprep.subr.mxu0 0.0
    %1759 = vmatpush1.msra.mxu0 0.0
    %1760 = vmatprep.subr.mxu0 0.0
    %1761 = vmatpush1.msra.mxu0 0.0
    %1762 = vmatprep.subr.mxu0 0.0
    %1763 = vmatpush1.msra.mxu0 0.0
    %1764 = vmatprep.subr.mxu0 0.0
    %1765 = vmatpush1.msra.mxu0 0.0
    %1766 = vmatprep.subr.mxu0 0.0
    %1767 = vmatpush1.msra.mxu0 0.0
    %1768 = vmatprep.subr.mxu0 0.0
    %1769 = vmatpush1.msra.mxu0 0.0
    %1770 = vmatprep.subr.mxu0 0.0
    %1771 = vmatpush1.msra.mxu0 0.0
    %1772 = vmatprep.subr.mxu0 0.0
    %1773 = vmatpush1.msra.mxu0 0.0
    %1774 = vmatprep.subr.mxu0 0.0
    %1775 = vmatpush1.msra.mxu0 0.0
    %1776 = vmatprep.subr.mxu0 0.0
    %1777 = vmatpush1.msra.mxu0 0.0
    %1778 = vmatprep.subr.mxu0 0.0
    %1779 = vmatpush1.msra.mxu0 0.0
    %1780 = vmatprep.subr.mxu0 0.0
    %1781 = vmatpush1.msra.mxu0 0.0
    %1782 = vmatprep.subr.mxu0 0.0
    %1783 = vmatpush1.msra.mxu0 0.0
    %1784 = vmatprep.subr.mxu0 0.0
    %1785 = vmatpush1.msra.mxu0 0.0
    %1786 = vmatprep.subr.mxu0 0.0
    %1787 = vmatpush1.msra.mxu0 0.0
    %1788 = vmatprep.subr.mxu0 0.0
    %1789 = vmatpush1.msra.mxu0 0.0
    %1790 = vmatprep.subr.mxu0 0.0
    %1791 = vmatpush1.msra.mxu0 0.0
    %1792 = vmatprep.subr.mxu0 0.0
    %1793 = vmatpush1.msra.mxu0 0.0
    %1794 = vmatprep.subr.mxu0 0.0
    %1795 = vmatpush1.msra.mxu0 0.0
    %1796 = vmatprep.mubr.f32.mxu0 0.0
    %1797 = vmatmul.mubr.f32.gmra.mrb[0].mxu0 %v1730
    %v1798 = vpop.f32.mrb[0].mxu0
    %v1799 = vadd.f32 %v1728, %v1798
    %v1800 = vpop.f32.mrb[0].mxu0
    %1801 = vdwg.mxu0
    %vm1802 = vcmask 123904
    %1803 = vst.msk [vmem:[#allocation3] sm:$0x3] %vm1802, %v1799
    // Predicated region
    $region34: #{lenet_forward.1} parent=1 // pred_check
      _
    $region35: #{lenet_forward.1} parent=1 // pred_check_branch
      %1805 = sbr.rel (0) target = $region37
    $region36: #{lenet_forward.1} parent=1 // pred_region
      %s1807 = ssub.s32 32, 32
      %1808 = vsyncadd [#allocation4], %s1807
      %s1810 = sshll.u32 [#allocation3], 4
      %s1811 = int_to_ptr.vmem [resolvable:$true] %s1810
      %1813 = dma.vmem_to_hbm [thread:$0]  %s1811, 32, %s8, [#allocation4]
    $region37: #{lenet_forward.1} parent=1 // pred_fallthru
      _
    // Predicated region
    $region38: #{lenet_forward.1} parent=1 // pred_check
      _
    $region39: #{lenet_forward.1} parent=1 // pred_check_branch
      %1815 = sbr.rel (0) target = $region41
    $region40: #{lenet_forward.1} parent=1 // pred_region
      %1816 = dma.done [#allocation4], 32
    $region41: #{lenet_forward.1} parent=1 // pred_fallthru
      _
    %1817 = vsyncpa [#allocation4], 1

</llo_original>
